<compile_context>
chip_gen: v6e
topology: v6e:2x2x1
jax: 0.10.0
libtpu: 0.0.40
codegen_flags: <defaults>
</compile_context>

<pallas_src>
import jax
import jax.numpy as jnp
from jax.experimental import pallas as pl
from jax.experimental.pallas import tpu as pltpu


def _round_up(x, m):
    return ((x + m - 1) // m) * m


# ----------------------------- Pallas kernel -------------------------------

def make_rnnlm_kernel(num_layers: int, seq_len: int, bp: int, hp: int):
    """L-layer tanh RNN + output projection on padded, flat activations.

    Ref order:
      inputs : x(T*Bp, Ep),
               [Wih_l(Kp, Hp), Whh_l(Hp, Hp), b_l(1, Hp)] * L,
               Wout(Hp, Vp), bout(1, Vp)
      outputs: logits(T*Bp, Vp), hidden(L, Bp, Hp)
      scratch: two VMEM (T*Bp, Hp) ping-pong buffers
    """
    L, T, Bp, Hp = num_layers, seq_len, bp, hp
    n_in = 3 + 3 * L

    def kernel(*refs):
        x_ref = refs[0]
        wout_ref = refs[1 + 3 * L]
        bout_ref = refs[2 + 3 * L]
        logits_ref = refs[n_in]
        hidden_ref = refs[n_in + 1]
        scratch = [refs[n_in + 2], refs[n_in + 3]]

        cur_in = x_ref                                   # (T*Bp, Kp) ref
        for l in range(L):
            wih = refs[1 + 3 * l][...]                   # (Kp, Hp)
            whh = refs[2 + 3 * l][...]                   # (Hp, Hp)
            b = refs[3 + 3 * l][...]                     # (1, Hp)
            out_s = scratch[l % 2]                       # (T*Bp, Hp)

            # Hoisted input projection: ONE GEMM over all T*Bp rows, staged
            # into this layer's scratch buffer (each row is overwritten by the
            # hidden state right after it is consumed below).
            out_s[...] = (
                jnp.dot(cur_in[...], wih, preferred_element_type=jnp.float32)
                + b)

            # Serial recurrence, fully unrolled (T static & small):
            #   h_t = tanh(xW[t] + h_{t-1} @ Whh)
            h = jnp.zeros((Bp, Hp), jnp.float32)
            for t in range(T):
                row = pl.ds(t * Bp, Bp)                  # static, sublane-aligned
                h = jnp.tanh(
                    out_s[row, :]
                    + jnp.dot(h, whh, preferred_element_type=jnp.float32))
                out_s[row, :] = h                        # lane-dense store
            hidden_ref[l] = h
            cur_in = out_s

        # Output projection: one lane-dense GEMM over all (T*Bp) rows.
        logits_ref[...] = (
            jnp.dot(cur_in[...], wout_ref[...],
                    preferred_element_type=jnp.float32)
            + bout_ref[...])

    return kernel


# ------------------------------ JAX wrapper ---------------------------------

def rnnlm_forward(ids, params, *, num_layers, dim_size):
    """ids: int32 (B, T). Returns (logits (B*T, V), hidden (L, B, H))."""
    B, T = ids.shape
    emb = params["embedding"]                            # (V, E)
    V, E = emb.shape
    H, L = dim_size, num_layers

    Bp = _round_up(B, 8)                                 # sublane tile
    Ep = _round_up(E, 128)                               # lane tile
    Hp = _round_up(H, 128)
    Vp = _round_up(V, 128)

    # Time-major embedding gather (glue), padded to hardware tiles.
    emb_p = jnp.pad(emb, ((0, 0), (0, Ep - E)))
    x = jnp.take(emb_p, ids.T, axis=0)                   # (T, B, Ep)
    x = jnp.pad(x, ((0, 0), (0, Bp - B), (0, 0)))        # (T, Bp, Ep)
    x = x.reshape(T * Bp, Ep)

    inputs = [x]
    for l in range(L):
        k_in = E if l == 0 else H
        kp_in = Ep if l == 0 else Hp
        inputs += [
            jnp.pad(params[f"wih{l}"], ((0, kp_in - k_in), (0, Hp - H))),
            jnp.pad(params[f"whh{l}"], ((0, Hp - H), (0, Hp - H))),
            jnp.pad(params[f"b{l}"], ((0, 0), (0, Hp - H))),
        ]
    inputs += [
        jnp.pad(params["wout"], ((0, Hp - H), (0, Vp - V))),
        jnp.pad(params["bout"], ((0, 0), (0, Vp - V))),
    ]

    vmem = pl.BlockSpec(memory_space=pltpu.MemorySpace.VMEM)
    kernel = make_rnnlm_kernel(L, T, Bp, Hp)

    logits_p, hidden_p = pl.pallas_call(
        kernel,
        out_shape=(
            jax.ShapeDtypeStruct((T * Bp, Vp), jnp.float32),
            jax.ShapeDtypeStruct((L, Bp, Hp), jnp.float32),
        ),
        in_specs=[vmem] * len(inputs),
        out_specs=(vmem, vmem),
        scratch_shapes=[
            pltpu.VMEM((T * Bp, Hp), jnp.float32),
            pltpu.VMEM((T * Bp, Hp), jnp.float32),
        ],
    )(*inputs)

    # Un-pad and reorder rows to PyTorch's batch-first out.reshape(B*T, V).
    logits = logits_p.reshape(T, Bp, Vp)[:, :B, :V]
    logits = jnp.transpose(logits, (1, 0, 2)).reshape(B * T, V)
    hidden = hidden_p[:, :B, :H]
    return logits, hidden


# ------------------------- reference (plain JAX) ----------------------------

def rnnlm_reference(ids, params, *, num_layers, dim_size):
    B, T = ids.shape
    V, E = params["embedding"].shape
    H, L = dim_size, num_layers
    x = jnp.take(params["embedding"], ids, axis=0)        # (B, T, E)
    hiddens = []
    for l in range(L):
        wih, whh, b = params[f"wih{l}"], params[f"whh{l}"], params[f"b{l}"]
        h = jnp.zeros((B, H), jnp.float32)
        outs = []
        for t in range(T):
            h = jnp.tanh(x[:, t, :] @ wih + h @ whh + b)
            outs.append(h)
        x = jnp.stack(outs, axis=1)                        # (B, T, H)
        hiddens.append(h)
    logits = x.reshape(B * T, H) @ params["wout"] + params["bout"]
    return logits, jnp.stack(hiddens, axis=0)


# --------------------------------- main --------------------------------------

if __name__ == "__main__":
    # Small, deterministic config implied by the module:
    #   vocab_size=64, embed_dim=32, dim_size(H)=32, num_layers=2, B=2, T=8
    VOCAB, EMBED, HIDDEN, LAYERS = 64, 32, 32, 2
    B, T = 2, 8

    key = jax.random.PRNGKey(0)
    keys = jax.random.split(key, 4 + 4 * LAYERS)
    scale = 1.0 / jnp.sqrt(jnp.float32(HIDDEN))

    params = {
        "embedding": jax.random.normal(keys[0], (VOCAB, EMBED), jnp.float32),
        "wout": jax.random.uniform(keys[1], (HIDDEN, VOCAB), jnp.float32,
                                   -scale, scale),
        "bout": jax.random.uniform(keys[2], (1, VOCAB), jnp.float32,
                                   -scale, scale),
    }
    for l in range(LAYERS):
        in_dim = EMBED if l == 0 else HIDDEN
        k0, k1, k2 = jax.random.split(keys[4 + l], 3)
        params[f"wih{l}"] = jax.random.uniform(k0, (in_dim, HIDDEN),
                                               jnp.float32, -scale, scale)
        params[f"whh{l}"] = jax.random.uniform(k1, (HIDDEN, HIDDEN),
                                               jnp.float32, -scale, scale)
        # PyTorch has separate b_ih + b_hh; their sum is one (1, H) bias.
        params[f"b{l}"] = jax.random.uniform(k2, (1, HIDDEN),
                                             jnp.float32, -scale, scale)

    ids = jax.random.randint(keys[3], (B, T), 0, VOCAB, dtype=jnp.int32)

    logits, hidden = rnnlm_forward(ids, params,
                                   num_layers=LAYERS, dim_size=HIDDEN)
    logits = jax.block_until_ready(logits)
    hidden = jax.block_until_ready(hidden)

    ref_logits, ref_hidden = rnnlm_reference(ids, params,
                                             num_layers=LAYERS,
                                             dim_size=HIDDEN)

    assert logits.shape == (B * T, VOCAB)
    assert hidden.shape == (LAYERS, B, HIDDEN)
    assert jnp.allclose(logits, ref_logits, atol=1e-4, rtol=1e-4)
    assert jnp.allclose(hidden, ref_hidden, atol=1e-4, rtol=1e-4)

    print("KERNEL_OK")
</pallas_src>

<mosaic_0001>
module attributes {stable_mosaic.version = 11 : i64} {
  func.func @kernel(%arg0: memref<64x128xf32, #tpu.memory_space<vmem>>, %arg1: memref<128x128xf32, #tpu.memory_space<vmem>>, %arg2: memref<128x128xf32, #tpu.memory_space<vmem>>, %arg3: memref<1x128xf32, #tpu.memory_space<vmem>>, %arg4: memref<128x128xf32, #tpu.memory_space<vmem>>, %arg5: memref<128x128xf32, #tpu.memory_space<vmem>>, %arg6: memref<1x128xf32, #tpu.memory_space<vmem>>, %arg7: memref<128x128xf32, #tpu.memory_space<vmem>>, %arg8: memref<1x128xf32, #tpu.memory_space<vmem>>, %arg9: memref<64x128xf32, #tpu.memory_space<vmem>>, %arg10: memref<2x8x128xf32, #tpu.memory_space<vmem>>, %arg11: memref<64x128xf32, #tpu.memory_space<vmem>>, %arg12: memref<64x128xf32, #tpu.memory_space<vmem>>) attributes {dimension_semantics = [], scalar_prefetch = 0 : i64, scratch_operands = 2 : i64, tpu.core_type = #tpu.core_type<tc>} {
    %c0 = arith.constant 0 : index
    %c0_0 = arith.constant 0 : index
    %0 = vector.load %arg1[%c0, %c0_0] : memref<128x128xf32, #tpu.memory_space<vmem>>, vector<128x128xf32>
    %c0_1 = arith.constant 0 : index
    %c0_2 = arith.constant 0 : index
    %1 = vector.load %arg2[%c0_1, %c0_2] : memref<128x128xf32, #tpu.memory_space<vmem>>, vector<128x128xf32>
    %c0_3 = arith.constant 0 : index
    %c0_4 = arith.constant 0 : index
    %2 = vector.load %arg3[%c0_3, %c0_4] : memref<1x128xf32, #tpu.memory_space<vmem>>, vector<1x128xf32>
    %c0_5 = arith.constant 0 : index
    %c0_6 = arith.constant 0 : index
    %3 = vector.load %arg0[%c0_5, %c0_6] : memref<64x128xf32, #tpu.memory_space<vmem>>, vector<64x128xf32>
    %cst = arith.constant dense<0.000000e+00> : vector<64x128xf32>
    %4 = tpu.matmul %3, %0, %cst {dimension_numbers = #tpu.dot_dimension_numbers<[1], [0], [0], [1], [0, 0, 1, 1], [], []>} : vector<64x128xf32>, vector<128x128xf32>, vector<64x128xf32> -> vector<64x128xf32>
    %5 = vector.broadcast %2 : vector<1x128xf32> to vector<64x128xf32>
    %6 = arith.addf %4, %5 : vector<64x128xf32>
    %c0_7 = arith.constant 0 : index
    %c0_8 = arith.constant 0 : index
    %7 = vector.load %arg11[%c0_7, %c0_8] : memref<64x128xf32, #tpu.memory_space<vmem>>, vector<64x128xf32>
    tpu.vector_store %arg11[%c0_7, %c0_8], %6 {strides = array<i32>} : memref<64x128xf32, #tpu.memory_space<vmem>>, vector<64x128xf32>,
    %cst_9 = arith.constant 0.000000e+00 : f32
    %8 = vector.broadcast %cst_9 : f32 to vector<8x128xf32>
    %c0_10 = arith.constant 0 : index
    %c0_11 = arith.constant 0 : index
    %9 = vector.load %arg11[%c0_10, %c0_11] : memref<64x128xf32, #tpu.memory_space<vmem>>, vector<8x128xf32>
    %cst_12 = arith.constant dense<0.000000e+00> : vector<8x128xf32>
    %10 = tpu.matmul %8, %1, %cst_12 {dimension_numbers = #tpu.dot_dimension_numbers<[1], [0], [0], [1], [0, 0, 1, 1], [], []>} : vector<8x128xf32>, vector<128x128xf32>, vector<8x128xf32> -> vector<8x128xf32>
    %11 = arith.addf %9, %10 : vector<8x128xf32>
    %12 = math.tanh %11 : vector<8x128xf32>
    %c0_13 = arith.constant 0 : index
    %c0_14 = arith.constant 0 : index
    %13 = vector.load %arg11[%c0_13, %c0_14] : memref<64x128xf32, #tpu.memory_space<vmem>>, vector<8x128xf32>
    tpu.vector_store %arg11[%c0_13, %c0_14], %12 {strides = array<i32>} : memref<64x128xf32, #tpu.memory_space<vmem>>, vector<8x128xf32>,
    %c8 = arith.constant 8 : index
    %c0_15 = arith.constant 0 : index
    %14 = vector.load %arg11[%c8, %c0_15] : memref<64x128xf32, #tpu.memory_space<vmem>>, vector<8x128xf32>
    %cst_16 = arith.constant dense<0.000000e+00> : vector<8x128xf32>
    %15 = tpu.matmul %12, %1, %cst_16 {dimension_numbers = #tpu.dot_dimension_numbers<[1], [0], [0], [1], [0, 0, 1, 1], [], []>} : vector<8x128xf32>, vector<128x128xf32>, vector<8x128xf32> -> vector<8x128xf32>
    %16 = arith.addf %14, %15 : vector<8x128xf32>
    %17 = math.tanh %16 : vector<8x128xf32>
    %c8_17 = arith.constant 8 : index
    %c0_18 = arith.constant 0 : index
    %18 = vector.load %arg11[%c8_17, %c0_18] : memref<64x128xf32, #tpu.memory_space<vmem>>, vector<8x128xf32>
    tpu.vector_store %arg11[%c8_17, %c0_18], %17 {strides = array<i32>} : memref<64x128xf32, #tpu.memory_space<vmem>>, vector<8x128xf32>,
    %c16 = arith.constant 16 : index
    %c0_19 = arith.constant 0 : index
    %19 = vector.load %arg11[%c16, %c0_19] : memref<64x128xf32, #tpu.memory_space<vmem>>, vector<8x128xf32>
    %cst_20 = arith.constant dense<0.000000e+00> : vector<8x128xf32>
    %20 = tpu.matmul %17, %1, %cst_20 {dimension_numbers = #tpu.dot_dimension_numbers<[1], [0], [0], [1], [0, 0, 1, 1], [], []>} : vector<8x128xf32>, vector<128x128xf32>, vector<8x128xf32> -> vector<8x128xf32>
    %21 = arith.addf %19, %20 : vector<8x128xf32>
    %22 = math.tanh %21 : vector<8x128xf32>
    %c16_21 = arith.constant 16 : index
    %c0_22 = arith.constant 0 : index
    %23 = vector.load %arg11[%c16_21, %c0_22] : memref<64x128xf32, #tpu.memory_space<vmem>>, vector<8x128xf32>
    tpu.vector_store %arg11[%c16_21, %c0_22], %22 {strides = array<i32>} : memref<64x128xf32, #tpu.memory_space<vmem>>, vector<8x128xf32>,
    %c24 = arith.constant 24 : index
    %c0_23 = arith.constant 0 : index
    %24 = vector.load %arg11[%c24, %c0_23] : memref<64x128xf32, #tpu.memory_space<vmem>>, vector<8x128xf32>
    %cst_24 = arith.constant dense<0.000000e+00> : vector<8x128xf32>
    %25 = tpu.matmul %22, %1, %cst_24 {dimension_numbers = #tpu.dot_dimension_numbers<[1], [0], [0], [1], [0, 0, 1, 1], [], []>} : vector<8x128xf32>, vector<128x128xf32>, vector<8x128xf32> -> vector<8x128xf32>
    %26 = arith.addf %24, %25 : vector<8x128xf32>
    %27 = math.tanh %26 : vector<8x128xf32>
    %c24_25 = arith.constant 24 : index
    %c0_26 = arith.constant 0 : index
    %28 = vector.load %arg11[%c24_25, %c0_26] : memref<64x128xf32, #tpu.memory_space<vmem>>, vector<8x128xf32>
    tpu.vector_store %arg11[%c24_25, %c0_26], %27 {strides = array<i32>} : memref<64x128xf32, #tpu.memory_space<vmem>>, vector<8x128xf32>,
    %c32 = arith.constant 32 : index
    %c0_27 = arith.constant 0 : index
    %29 = vector.load %arg11[%c32, %c0_27] : memref<64x128xf32, #tpu.memory_space<vmem>>, vector<8x128xf32>
    %cst_28 = arith.constant dense<0.000000e+00> : vector<8x128xf32>
    %30 = tpu.matmul %27, %1, %cst_28 {dimension_numbers = #tpu.dot_dimension_numbers<[1], [0], [0], [1], [0, 0, 1, 1], [], []>} : vector<8x128xf32>, vector<128x128xf32>, vector<8x128xf32> -> vector<8x128xf32>
    %31 = arith.addf %29, %30 : vector<8x128xf32>
    %32 = math.tanh %31 : vector<8x128xf32>
    %c32_29 = arith.constant 32 : index
    %c0_30 = arith.constant 0 : index
    %33 = vector.load %arg11[%c32_29, %c0_30] : memref<64x128xf32, #tpu.memory_space<vmem>>, vector<8x128xf32>
    tpu.vector_store %arg11[%c32_29, %c0_30], %32 {strides = array<i32>} : memref<64x128xf32, #tpu.memory_space<vmem>>, vector<8x128xf32>,
    %c40 = arith.constant 40 : index
    %c0_31 = arith.constant 0 : index
    %34 = vector.load %arg11[%c40, %c0_31] : memref<64x128xf32, #tpu.memory_space<vmem>>, vector<8x128xf32>
    %cst_32 = arith.constant dense<0.000000e+00> : vector<8x128xf32>
    %35 = tpu.matmul %32, %1, %cst_32 {dimension_numbers = #tpu.dot_dimension_numbers<[1], [0], [0], [1], [0, 0, 1, 1], [], []>} : vector<8x128xf32>, vector<128x128xf32>, vector<8x128xf32> -> vector<8x128xf32>
    %36 = arith.addf %34, %35 : vector<8x128xf32>
    %37 = math.tanh %36 : vector<8x128xf32>
    %c40_33 = arith.constant 40 : index
    %c0_34 = arith.constant 0 : index
    %38 = vector.load %arg11[%c40_33, %c0_34] : memref<64x128xf32, #tpu.memory_space<vmem>>, vector<8x128xf32>
    tpu.vector_store %arg11[%c40_33, %c0_34], %37 {strides = array<i32>} : memref<64x128xf32, #tpu.memory_space<vmem>>, vector<8x128xf32>,
    %c48 = arith.constant 48 : index
    %c0_35 = arith.constant 0 : index
    %39 = vector.load %arg11[%c48, %c0_35] : memref<64x128xf32, #tpu.memory_space<vmem>>, vector<8x128xf32>
    %cst_36 = arith.constant dense<0.000000e+00> : vector<8x128xf32>
    %40 = tpu.matmul %37, %1, %cst_36 {dimension_numbers = #tpu.dot_dimension_numbers<[1], [0], [0], [1], [0, 0, 1, 1], [], []>} : vector<8x128xf32>, vector<128x128xf32>, vector<8x128xf32> -> vector<8x128xf32>
    %41 = arith.addf %39, %40 : vector<8x128xf32>
    %42 = math.tanh %41 : vector<8x128xf32>
    %c48_37 = arith.constant 48 : index
    %c0_38 = arith.constant 0 : index
    %43 = vector.load %arg11[%c48_37, %c0_38] : memref<64x128xf32, #tpu.memory_space<vmem>>, vector<8x128xf32>
    tpu.vector_store %arg11[%c48_37, %c0_38], %42 {strides = array<i32>} : memref<64x128xf32, #tpu.memory_space<vmem>>, vector<8x128xf32>,
    %c56 = arith.constant 56 : index
    %c0_39 = arith.constant 0 : index
    %44 = vector.load %arg11[%c56, %c0_39] : memref<64x128xf32, #tpu.memory_space<vmem>>, vector<8x128xf32>
    %cst_40 = arith.constant dense<0.000000e+00> : vector<8x128xf32>
    %45 = tpu.matmul %42, %1, %cst_40 {dimension_numbers = #tpu.dot_dimension_numbers<[1], [0], [0], [1], [0, 0, 1, 1], [], []>} : vector<8x128xf32>, vector<128x128xf32>, vector<8x128xf32> -> vector<8x128xf32>
    %46 = arith.addf %44, %45 : vector<8x128xf32>
    %47 = math.tanh %46 : vector<8x128xf32>
    %c56_41 = arith.constant 56 : index
    %c0_42 = arith.constant 0 : index
    %48 = vector.load %arg11[%c56_41, %c0_42] : memref<64x128xf32, #tpu.memory_space<vmem>>, vector<8x128xf32>
    tpu.vector_store %arg11[%c56_41, %c0_42], %47 {strides = array<i32>} : memref<64x128xf32, #tpu.memory_space<vmem>>, vector<8x128xf32>,
    %c0_43 = arith.constant 0 : index
    %c0_44 = arith.constant 0 : index
    %c0_45 = arith.constant 0 : index
    %49 = vector.load %arg10[%c0_43, %c0_44, %c0_45] : memref<2x8x128xf32, #tpu.memory_space<vmem>>, vector<1x8x128xf32>
    %50 = vector.shape_cast %49 : vector<1x8x128xf32> to vector<8x128xf32>
    %51 = vector.shape_cast %47 : vector<8x128xf32> to vector<1x8x128xf32>
    tpu.vector_store %arg10[%c0_43, %c0_44, %c0_45], %51 {strides = array<i32>} : memref<2x8x128xf32, #tpu.memory_space<vmem>>, vector<1x8x128xf32>,
    %c0_46 = arith.constant 0 : index
    %c0_47 = arith.constant 0 : index
    %52 = vector.load %arg4[%c0_46, %c0_47] : memref<128x128xf32, #tpu.memory_space<vmem>>, vector<128x128xf32>
    %c0_48 = arith.constant 0 : index
    %c0_49 = arith.constant 0 : index
    %53 = vector.load %arg5[%c0_48, %c0_49] : memref<128x128xf32, #tpu.memory_space<vmem>>, vector<128x128xf32>
    %c0_50 = arith.constant 0 : index
    %c0_51 = arith.constant 0 : index
    %54 = vector.load %arg6[%c0_50, %c0_51] : memref<1x128xf32, #tpu.memory_space<vmem>>, vector<1x128xf32>
    %c0_52 = arith.constant 0 : index
    %c0_53 = arith.constant 0 : index
    %55 = vector.load %arg11[%c0_52, %c0_53] : memref<64x128xf32, #tpu.memory_space<vmem>>, vector<64x128xf32>
    %cst_54 = arith.constant dense<0.000000e+00> : vector<64x128xf32>
    %56 = tpu.matmul %55, %52, %cst_54 {dimension_numbers = #tpu.dot_dimension_numbers<[1], [0], [0], [1], [0, 0, 1, 1], [], []>} : vector<64x128xf32>, vector<128x128xf32>, vector<64x128xf32> -> vector<64x128xf32>
    %57 = vector.broadcast %54 : vector<1x128xf32> to vector<64x128xf32>
    %58 = arith.addf %56, %57 : vector<64x128xf32>
    %c0_55 = arith.constant 0 : index
    %c0_56 = arith.constant 0 : index
    %59 = vector.load %arg12[%c0_55, %c0_56] : memref<64x128xf32, #tpu.memory_space<vmem>>, vector<64x128xf32>
    tpu.vector_store %arg12[%c0_55, %c0_56], %58 {strides = array<i32>} : memref<64x128xf32, #tpu.memory_space<vmem>>, vector<64x128xf32>,
    %cst_57 = arith.constant 0.000000e+00 : f32
    %60 = vector.broadcast %cst_57 : f32 to vector<8x128xf32>
    %c0_58 = arith.constant 0 : index
    %c0_59 = arith.constant 0 : index
    %61 = vector.load %arg12[%c0_58, %c0_59] : memref<64x128xf32, #tpu.memory_space<vmem>>, vector<8x128xf32>
    %cst_60 = arith.constant dense<0.000000e+00> : vector<8x128xf32>
    %62 = tpu.matmul %60, %53, %cst_60 {dimension_numbers = #tpu.dot_dimension_numbers<[1], [0], [0], [1], [0, 0, 1, 1], [], []>} : vector<8x128xf32>, vector<128x128xf32>, vector<8x128xf32> -> vector<8x128xf32>
    %63 = arith.addf %61, %62 : vector<8x128xf32>
    %64 = math.tanh %63 : vector<8x128xf32>
    %c0_61 = arith.constant 0 : index
    %c0_62 = arith.constant 0 : index
    %65 = vector.load %arg12[%c0_61, %c0_62] : memref<64x128xf32, #tpu.memory_space<vmem>>, vector<8x128xf32>
    tpu.vector_store %arg12[%c0_61, %c0_62], %64 {strides = array<i32>} : memref<64x128xf32, #tpu.memory_space<vmem>>, vector<8x128xf32>,
    %c8_63 = arith.constant 8 : index
    %c0_64 = arith.constant 0 : index
    %66 = vector.load %arg12[%c8_63, %c0_64] : memref<64x128xf32, #tpu.memory_space<vmem>>, vector<8x128xf32>
    %cst_65 = arith.constant dense<0.000000e+00> : vector<8x128xf32>
    %67 = tpu.matmul %64, %53, %cst_65 {dimension_numbers = #tpu.dot_dimension_numbers<[1], [0], [0], [1], [0, 0, 1, 1], [], []>} : vector<8x128xf32>, vector<128x128xf32>, vector<8x128xf32> -> vector<8x128xf32>
    %68 = arith.addf %66, %67 : vector<8x128xf32>
    %69 = math.tanh %68 : vector<8x128xf32>
    %c8_66 = arith.constant 8 : index
    %c0_67 = arith.constant 0 : index
    %70 = vector.load %arg12[%c8_66, %c0_67] : memref<64x128xf32, #tpu.memory_space<vmem>>, vector<8x128xf32>
    tpu.vector_store %arg12[%c8_66, %c0_67], %69 {strides = array<i32>} : memref<64x128xf32, #tpu.memory_space<vmem>>, vector<8x128xf32>,
    %c16_68 = arith.constant 16 : index
    %c0_69 = arith.constant 0 : index
    %71 = vector.load %arg12[%c16_68, %c0_69] : memref<64x128xf32, #tpu.memory_space<vmem>>, vector<8x128xf32>
    %cst_70 = arith.constant dense<0.000000e+00> : vector<8x128xf32>
    %72 = tpu.matmul %69, %53, %cst_70 {dimension_numbers = #tpu.dot_dimension_numbers<[1], [0], [0], [1], [0, 0, 1, 1], [], []>} : vector<8x128xf32>, vector<128x128xf32>, vector<8x128xf32> -> vector<8x128xf32>
    %73 = arith.addf %71, %72 : vector<8x128xf32>
    %74 = math.tanh %73 : vector<8x128xf32>
    %c16_71 = arith.constant 16 : index
    %c0_72 = arith.constant 0 : index
    %75 = vector.load %arg12[%c16_71, %c0_72] : memref<64x128xf32, #tpu.memory_space<vmem>>, vector<8x128xf32>
    tpu.vector_store %arg12[%c16_71, %c0_72], %74 {strides = array<i32>} : memref<64x128xf32, #tpu.memory_space<vmem>>, vector<8x128xf32>,
    %c24_73 = arith.constant 24 : index
    %c0_74 = arith.constant 0 : index
    %76 = vector.load %arg12[%c24_73, %c0_74] : memref<64x128xf32, #tpu.memory_space<vmem>>, vector<8x128xf32>
    %cst_75 = arith.constant dense<0.000000e+00> : vector<8x128xf32>
    %77 = tpu.matmul %74, %53, %cst_75 {dimension_numbers = #tpu.dot_dimension_numbers<[1], [0], [0], [1], [0, 0, 1, 1], [], []>} : vector<8x128xf32>, vector<128x128xf32>, vector<8x128xf32> -> vector<8x128xf32>
    %78 = arith.addf %76, %77 : vector<8x128xf32>
    %79 = math.tanh %78 : vector<8x128xf32>
    %c24_76 = arith.constant 24 : index
    %c0_77 = arith.constant 0 : index
    %80 = vector.load %arg12[%c24_76, %c0_77] : memref<64x128xf32, #tpu.memory_space<vmem>>, vector<8x128xf32>
    tpu.vector_store %arg12[%c24_76, %c0_77], %79 {strides = array<i32>} : memref<64x128xf32, #tpu.memory_space<vmem>>, vector<8x128xf32>,
    %c32_78 = arith.constant 32 : index
    %c0_79 = arith.constant 0 : index
    %81 = vector.load %arg12[%c32_78, %c0_79] : memref<64x128xf32, #tpu.memory_space<vmem>>, vector<8x128xf32>
    %cst_80 = arith.constant dense<0.000000e+00> : vector<8x128xf32>
    %82 = tpu.matmul %79, %53, %cst_80 {dimension_numbers = #tpu.dot_dimension_numbers<[1], [0], [0], [1], [0, 0, 1, 1], [], []>} : vector<8x128xf32>, vector<128x128xf32>, vector<8x128xf32> -> vector<8x128xf32>
    %83 = arith.addf %81, %82 : vector<8x128xf32>
    %84 = math.tanh %83 : vector<8x128xf32>
    %c32_81 = arith.constant 32 : index
    %c0_82 = arith.constant 0 : index
    %85 = vector.load %arg12[%c32_81, %c0_82] : memref<64x128xf32, #tpu.memory_space<vmem>>, vector<8x128xf32>
    tpu.vector_store %arg12[%c32_81, %c0_82], %84 {strides = array<i32>} : memref<64x128xf32, #tpu.memory_space<vmem>>, vector<8x128xf32>,
    %c40_83 = arith.constant 40 : index
    %c0_84 = arith.constant 0 : index
    %86 = vector.load %arg12[%c40_83, %c0_84] : memref<64x128xf32, #tpu.memory_space<vmem>>, vector<8x128xf32>
    %cst_85 = arith.constant dense<0.000000e+00> : vector<8x128xf32>
    %87 = tpu.matmul %84, %53, %cst_85 {dimension_numbers = #tpu.dot_dimension_numbers<[1], [0], [0], [1], [0, 0, 1, 1], [], []>} : vector<8x128xf32>, vector<128x128xf32>, vector<8x128xf32> -> vector<8x128xf32>
    %88 = arith.addf %86, %87 : vector<8x128xf32>
    %89 = math.tanh %88 : vector<8x128xf32>
    %c40_86 = arith.constant 40 : index
    %c0_87 = arith.constant 0 : index
    %90 = vector.load %arg12[%c40_86, %c0_87] : memref<64x128xf32, #tpu.memory_space<vmem>>, vector<8x128xf32>
    tpu.vector_store %arg12[%c40_86, %c0_87], %89 {strides = array<i32>} : memref<64x128xf32, #tpu.memory_space<vmem>>, vector<8x128xf32>,
    %c48_88 = arith.constant 48 : index
    %c0_89 = arith.constant 0 : index
    %91 = vector.load %arg12[%c48_88, %c0_89] : memref<64x128xf32, #tpu.memory_space<vmem>>, vector<8x128xf32>
    %cst_90 = arith.constant dense<0.000000e+00> : vector<8x128xf32>
    %92 = tpu.matmul %89, %53, %cst_90 {dimension_numbers = #tpu.dot_dimension_numbers<[1], [0], [0], [1], [0, 0, 1, 1], [], []>} : vector<8x128xf32>, vector<128x128xf32>, vector<8x128xf32> -> vector<8x128xf32>
    %93 = arith.addf %91, %92 : vector<8x128xf32>
    %94 = math.tanh %93 : vector<8x128xf32>
    %c48_91 = arith.constant 48 : index
    %c0_92 = arith.constant 0 : index
    %95 = vector.load %arg12[%c48_91, %c0_92] : memref<64x128xf32, #tpu.memory_space<vmem>>, vector<8x128xf32>
    tpu.vector_store %arg12[%c48_91, %c0_92], %94 {strides = array<i32>} : memref<64x128xf32, #tpu.memory_space<vmem>>, vector<8x128xf32>,
    %c56_93 = arith.constant 56 : index
    %c0_94 = arith.constant 0 : index
    %96 = vector.load %arg12[%c56_93, %c0_94] : memref<64x128xf32, #tpu.memory_space<vmem>>, vector<8x128xf32>
    %cst_95 = arith.constant dense<0.000000e+00> : vector<8x128xf32>
    %97 = tpu.matmul %94, %53, %cst_95 {dimension_numbers = #tpu.dot_dimension_numbers<[1], [0], [0], [1], [0, 0, 1, 1], [], []>} : vector<8x128xf32>, vector<128x128xf32>, vector<8x128xf32> -> vector<8x128xf32>
    %98 = arith.addf %96, %97 : vector<8x128xf32>
    %99 = math.tanh %98 : vector<8x128xf32>
    %c56_96 = arith.constant 56 : index
    %c0_97 = arith.constant 0 : index
    %100 = vector.load %arg12[%c56_96, %c0_97] : memref<64x128xf32, #tpu.memory_space<vmem>>, vector<8x128xf32>
    tpu.vector_store %arg12[%c56_96, %c0_97], %99 {strides = array<i32>} : memref<64x128xf32, #tpu.memory_space<vmem>>, vector<8x128xf32>,
    %c1 = arith.constant 1 : index
    %c0_98 = arith.constant 0 : index
    %c0_99 = arith.constant 0 : index
    %101 = vector.load %arg10[%c1, %c0_98, %c0_99] : memref<2x8x128xf32, #tpu.memory_space<vmem>>, vector<1x8x128xf32>
    %102 = vector.shape_cast %101 : vector<1x8x128xf32> to vector<8x128xf32>
    %103 = vector.shape_cast %99 : vector<8x128xf32> to vector<1x8x128xf32>
    tpu.vector_store %arg10[%c1, %c0_98, %c0_99], %103 {strides = array<i32>} : memref<2x8x128xf32, #tpu.memory_space<vmem>>, vector<1x8x128xf32>,
    %c0_100 = arith.constant 0 : index
    %c0_101 = arith.constant 0 : index
    %104 = vector.load %arg12[%c0_100, %c0_101] : memref<64x128xf32, #tpu.memory_space<vmem>>, vector<64x128xf32>
    %c0_102 = arith.constant 0 : index
    %c0_103 = arith.constant 0 : index
    %105 = vector.load %arg7[%c0_102, %c0_103] : memref<128x128xf32, #tpu.memory_space<vmem>>, vector<128x128xf32>
    %cst_104 = arith.constant dense<0.000000e+00> : vector<64x128xf32>
    %106 = tpu.matmul %104, %105, %cst_104 {dimension_numbers = #tpu.dot_dimension_numbers<[1], [0], [0], [1], [0, 0, 1, 1], [], []>} : vector<64x128xf32>, vector<128x128xf32>, vector<64x128xf32> -> vector<64x128xf32>
    %c0_105 = arith.constant 0 : index
    %c0_106 = arith.constant 0 : index
    %107 = vector.load %arg8[%c0_105, %c0_106] : memref<1x128xf32, #tpu.memory_space<vmem>>, vector<1x128xf32>
    %108 = vector.broadcast %107 : vector<1x128xf32> to vector<64x128xf32>
    %109 = arith.addf %106, %108 : vector<64x128xf32>
    %c0_107 = arith.constant 0 : index
    %c0_108 = arith.constant 0 : index
    %110 = vector.load %arg9[%c0_107, %c0_108] : memref<64x128xf32, #tpu.memory_space<vmem>>, vector<64x128xf32>
    tpu.vector_store %arg9[%c0_107, %c0_108], %109 {strides = array<i32>} : memref<64x128xf32, #tpu.memory_space<vmem>>, vector<64x128xf32>,
    return
  }
}

</mosaic_0001>

<llo_original>
// kernel: tpu_custom_call.1
$region0: #{tpu_custom_call.1}
  #allocation0 [shape = 'u32[]', space=smem, size = 0x4, offset = 0x4, fixed_abs, tag = 'smem constant byte address 0x4 - core index']
  #allocation1 [shape = 'u32[144,128]{1,0:T(1,128)}', space=vmem, size = 0x12000, scoped, tag = 'internal scratch']
  #allocation2 [shape = 'f32[64,128]{1,0:T(8,128)}', space=vmem, size = 0x8000, scoped, tag = 'scratch operand']
  #allocation3 [shape = 'f32[64,128]{1,0:T(8,128)}', space=vmem, size = 0x8000, scoped, tag = 'scratch operand']
  %s0 = inlined_call_operand.hbm [shape: f32[64,128], index: 0, kind: input, shape index: {}]
  %s1 = inlined_call_operand.hbm [shape: f32[128,128], index: 1, kind: input, shape index: {}]
  %s2 = inlined_call_operand.hbm [shape: f32[128,128], index: 2, kind: input, shape index: {}]
  %s3 = inlined_call_operand.vmem [shape: f32[1,128], index: 3, kind: input, shape index: {}]
  %s4 = inlined_call_operand.hbm [shape: f32[128,128], index: 4, kind: input, shape index: {}]
  %s5 = inlined_call_operand.hbm [shape: f32[128,128], index: 5, kind: input, shape index: {}]
  %s6 = inlined_call_operand.vmem [shape: f32[1,128], index: 6, kind: input, shape index: {}]
  %s7 = inlined_call_operand.hbm [shape: f32[128,128], index: 7, kind: input, shape index: {}]
  %s8 = inlined_call_operand.vmem [shape: f32[1,128], index: 8, kind: input, shape index: {}]
  %s9 = inlined_call_operand.hbm [shape: f32[64,128], index: 9, kind: output, shape index: {0}]
  %s10 = inlined_call_operand.hbm [shape: f32[2,8,128], index: 10, kind: output, shape index: {1}]
  %11 = xla_tuple %s9, %s10
  %s12 = sld [smem:[#allocation0]]
  $region78: #{tpu_custom_call.1} parent=0
    _
  %s14 = ssub.s32 1, %s12
  %s15 = scalar_select 0, %s14, %s12
  $region1: #{tpu_custom_call.1} parent=0
    #allocation4 [shape = 'u8[32768]{0}', space=vmem, size = 0x8000, scoped, tag = 'input window, operand 0, single buffered']
    #allocation5 [shape = 's32[1]{0}', space=sflag, size = 0x4, scoped, tag = 'scoped memory for tpu_custom_call.1']
    #allocation6 [shape = 's32[1]{0}', space=sflag, size = 0x4, scoped, tag = 'scoped memory for tpu_custom_call.1']
    #allocation7 [shape = 'u8[65536]{0}', space=vmem, size = 0x10000, scoped, tag = 'input window, operand 1, single buffered']
    #allocation8 [shape = 's32[1]{0}', space=sflag, size = 0x4, scoped, tag = 'scoped memory for tpu_custom_call.1']
    #allocation9 [shape = 'u8[65536]{0}', space=vmem, size = 0x10000, scoped, tag = 'input window, operand 2, single buffered']
    #allocation10 [shape = 'u8[65536]{0}', space=vmem, size = 0x10000, scoped, tag = 'input window, operand 4, single buffered']
    #allocation11 [shape = 's32[1]{0}', space=sflag, size = 0x4, scoped, tag = 'scoped memory for tpu_custom_call.1']
    #allocation12 [shape = 'u8[65536]{0}', space=vmem, size = 0x10000, scoped, tag = 'input window, operand 5, single buffered']
    #allocation13 [shape = 'u8[65536]{0}', space=vmem, size = 0x10000, scoped, tag = 'input window, operand 7, single buffered']
    #allocation14 [shape = 's32[1]{0}', space=sflag, size = 0x4, scoped, tag = 'scoped memory for tpu_custom_call.1']
    #allocation15 [shape = 'u8[32768]{0}', space=vmem, size = 0x8000, scoped, tag = 'output window, operand 0, single buffered']
    #allocation16 [shape = 'u8[8192]{0}', space=vmem, size = 0x2000, scoped, tag = 'output window, operand 1, single buffered']
    #allocation17 [shape = 's32[1]{0}', space=sflag, size = 0x4, scoped, tag = 'scoped memory for tpu_custom_call.1']
    %16 = vsyncpa [#allocation5], 0
    %17 = vsyncpa [#allocation8], 0
    %18 = vsyncpa [#allocation11], 0
    %19 = vsyncpa [#allocation14], 0
    %20 = vsyncpa [#allocation6], 0
    %21 = vsyncpa [#allocation17], 0
    // Predicated region
    $region2: #{tpu_custom_call.1} parent=1 // pred_check
      _
    $region3: #{tpu_custom_call.1} parent=1 // pred_check_branch
      %23 = sbr.rel (0) target = $region5
    $region4: #{tpu_custom_call.1} parent=1 // pred_region
      %s25 = ssub.s32 1024, 1024
      %26 = vsyncadd [#allocation5], %s25
      %s27 = sshll.u32 [#allocation4], 4
      %s28 = int_to_ptr.vmem [resolvable:$true] %s27
      %33 = dma.hbm_to_vmem [thread:$0]  %s0, 1024, %s28, [#allocation5], 128, 128, 8
    $region5: #{tpu_custom_call.1} parent=1 // pred_fallthru
      _
    // Predicated region
    $region6: #{tpu_custom_call.1} parent=1 // pred_check
      _
    $region7: #{tpu_custom_call.1} parent=1 // pred_check_branch
      %35 = sbr.rel (0) target = $region9
    $region8: #{tpu_custom_call.1} parent=1 // pred_region
      %s37 = ssub.s32 2048, 2048
      %38 = vsyncadd [#allocation8], %s37
      %s39 = sshll.u32 [#allocation7], 4
      %s40 = int_to_ptr.vmem [resolvable:$true] %s39
      %45 = dma.hbm_to_vmem [thread:$0]  %s1, 2048, %s40, [#allocation8], 128, 128, 8
    $region9: #{tpu_custom_call.1} parent=1 // pred_fallthru
      _
    // Predicated region
    $region10: #{tpu_custom_call.1} parent=1 // pred_check
      _
    $region11: #{tpu_custom_call.1} parent=1 // pred_check_branch
      %47 = sbr.rel (0) target = $region13
    $region12: #{tpu_custom_call.1} parent=1 // pred_region
      %s49 = ssub.s32 2048, 2048
      %50 = vsyncadd [#allocation8], %s49
      %s51 = sshll.u32 [#allocation9], 4
      %s52 = int_to_ptr.vmem [resolvable:$true] %s51
      %57 = dma.hbm_to_vmem [thread:$0]  %s2, 2048, %s52, [#allocation8], 128, 128, 8
    $region13: #{tpu_custom_call.1} parent=1 // pred_fallthru
      _
    // Predicated region
    $region14: #{tpu_custom_call.1} parent=1 // pred_check
      _
    $region15: #{tpu_custom_call.1} parent=1 // pred_check_branch
      %59 = sbr.rel (0) target = $region17
    $region16: #{tpu_custom_call.1} parent=1 // pred_region
      _
    $region17: #{tpu_custom_call.1} parent=1 // pred_fallthru
      _
    // Predicated region
    $region18: #{tpu_custom_call.1} parent=1 // pred_check
      _
    $region19: #{tpu_custom_call.1} parent=1 // pred_check_branch
      %61 = sbr.rel (0) target = $region21
    $region20: #{tpu_custom_call.1} parent=1 // pred_region
      %s63 = ssub.s32 2048, 2048
      %64 = vsyncadd [#allocation11], %s63
      %s65 = sshll.u32 [#allocation10], 4
      %s66 = int_to_ptr.vmem [resolvable:$true] %s65
      %71 = dma.hbm_to_vmem [thread:$0]  %s4, 2048, %s66, [#allocation11], 128, 128, 8
    $region21: #{tpu_custom_call.1} parent=1 // pred_fallthru
      _
    // Predicated region
    $region22: #{tpu_custom_call.1} parent=1 // pred_check
      _
    $region23: #{tpu_custom_call.1} parent=1 // pred_check_branch
      %73 = sbr.rel (0) target = $region25
    $region24: #{tpu_custom_call.1} parent=1 // pred_region
      %s75 = ssub.s32 2048, 2048
      %76 = vsyncadd [#allocation11], %s75
      %s77 = sshll.u32 [#allocation12], 4
      %s78 = int_to_ptr.vmem [resolvable:$true] %s77
      %83 = dma.hbm_to_vmem [thread:$0]  %s5, 2048, %s78, [#allocation11], 128, 128, 8
    $region25: #{tpu_custom_call.1} parent=1 // pred_fallthru
      _
    // Predicated region
    $region26: #{tpu_custom_call.1} parent=1 // pred_check
      _
    $region27: #{tpu_custom_call.1} parent=1 // pred_check_branch
      %85 = sbr.rel (0) target = $region29
    $region28: #{tpu_custom_call.1} parent=1 // pred_region
      _
    $region29: #{tpu_custom_call.1} parent=1 // pred_fallthru
      _
    // Predicated region
    $region30: #{tpu_custom_call.1} parent=1 // pred_check
      _
    $region31: #{tpu_custom_call.1} parent=1 // pred_check_branch
      %87 = sbr.rel (0) target = $region33
    $region32: #{tpu_custom_call.1} parent=1 // pred_region
      %s89 = ssub.s32 2048, 2048
      %90 = vsyncadd [#allocation14], %s89
      %s91 = sshll.u32 [#allocation13], 4
      %s92 = int_to_ptr.vmem [resolvable:$true] %s91
      %97 = dma.hbm_to_vmem [thread:$0]  %s7, 2048, %s92, [#allocation14], 128, 128, 8
    $region33: #{tpu_custom_call.1} parent=1 // pred_fallthru
      _
    // Predicated region
    $region34: #{tpu_custom_call.1} parent=1 // pred_check
      _
    $region35: #{tpu_custom_call.1} parent=1 // pred_check_branch
      %99 = sbr.rel (0) target = $region37
    $region36: #{tpu_custom_call.1} parent=1 // pred_region
      _
    $region37: #{tpu_custom_call.1} parent=1 // pred_fallthru
      _
    // Predicated region
    $region38: #{tpu_custom_call.1} parent=1 // pred_check
      _
    $region39: #{tpu_custom_call.1} parent=1 // pred_check_branch
      %101 = sbr.rel (0) target = $region41
    $region40: #{tpu_custom_call.1} parent=1 // pred_region
      %102 = dma.done [#allocation5], 1024
    $region41: #{tpu_custom_call.1} parent=1 // pred_fallthru
      _
    // Predicated region
    $region42: #{tpu_custom_call.1} parent=1 // pred_check
      _
    $region43: #{tpu_custom_call.1} parent=1 // pred_check_branch
      %104 = sbr.rel (0) target = $region45
    $region44: #{tpu_custom_call.1} parent=1 // pred_region
      %105 = dma.done [#allocation8], 2048
    $region45: #{tpu_custom_call.1} parent=1 // pred_fallthru
      _
    // Predicated region
    $region46: #{tpu_custom_call.1} parent=1 // pred_check
      _
    $region47: #{tpu_custom_call.1} parent=1 // pred_check_branch
      %107 = sbr.rel (0) target = $region49
    $region48: #{tpu_custom_call.1} parent=1 // pred_region
      %108 = dma.done [#allocation8], 2048
    $region49: #{tpu_custom_call.1} parent=1 // pred_fallthru
      _
    // Predicated region
    $region50: #{tpu_custom_call.1} parent=1 // pred_check
      _
    $region51: #{tpu_custom_call.1} parent=1 // pred_check_branch
      %110 = sbr.rel (0) target = $region53
    $region52: #{tpu_custom_call.1} parent=1 // pred_region
      %111 = dma.done [#allocation11], 2048
    $region53: #{tpu_custom_call.1} parent=1 // pred_fallthru
      _
    // Predicated region
    $region54: #{tpu_custom_call.1} parent=1 // pred_check
      _
    $region55: #{tpu_custom_call.1} parent=1 // pred_check_branch
      %113 = sbr.rel (0) target = $region57
    $region56: #{tpu_custom_call.1} parent=1 // pred_region
      %114 = dma.done [#allocation11], 2048
    $region57: #{tpu_custom_call.1} parent=1 // pred_fallthru
      _
    // Predicated region
    $region58: #{tpu_custom_call.1} parent=1 // pred_check
      _
    $region59: #{tpu_custom_call.1} parent=1 // pred_check_branch
      %116 = sbr.rel (0) target = $region61
    $region60: #{tpu_custom_call.1} parent=1 // pred_region
      %117 = dma.done [#allocation14], 2048
    $region61: #{tpu_custom_call.1} parent=1 // pred_fallthru
      _
    %v118 = vld [vmem:[#allocation7] sm:$0xff]
    %v119 = vld [vmem:[#allocation7 + $0x8] sm:$0xff]
    %v120 = vld [vmem:[#allocation7 + $0x10] sm:$0xff]
    %v121 = vld [vmem:[#allocation7 + $0x18] sm:$0xff]
    %v122 = vld [vmem:[#allocation7 + $0x20] sm:$0xff]
    %v123 = vld [vmem:[#allocation7 + $0x28] sm:$0xff]
    %v124 = vld [vmem:[#allocation7 + $0x30] sm:$0xff]
    %v125 = vld [vmem:[#allocation7 + $0x38] sm:$0xff]
    %v126 = vld [vmem:[#allocation7 + $0x40] sm:$0xff]
    %v127 = vld [vmem:[#allocation7 + $0x48] sm:$0xff]
    %v128 = vld [vmem:[#allocation7 + $0x50] sm:$0xff]
    %v129 = vld [vmem:[#allocation7 + $0x58] sm:$0xff]
    %v130 = vld [vmem:[#allocation7 + $0x60] sm:$0xff]
    %v131 = vld [vmem:[#allocation7 + $0x68] sm:$0xff]
    %v132 = vld [vmem:[#allocation7 + $0x70] sm:$0xff]
    %v133 = vld [vmem:[#allocation7 + $0x78] sm:$0xff]
    %v134 = vld [vmem:[#allocation9] sm:$0xff]
    %v135 = vld [vmem:[#allocation9 + $0x8] sm:$0xff]
    %v136 = vld [vmem:[#allocation9 + $0x10] sm:$0xff]
    %v137 = vld [vmem:[#allocation9 + $0x18] sm:$0xff]
    %v138 = vld [vmem:[#allocation9 + $0x20] sm:$0xff]
    %v139 = vld [vmem:[#allocation9 + $0x28] sm:$0xff]
    %v140 = vld [vmem:[#allocation9 + $0x30] sm:$0xff]
    %v141 = vld [vmem:[#allocation9 + $0x38] sm:$0xff]
    %v142 = vld [vmem:[#allocation9 + $0x40] sm:$0xff]
    %v143 = vld [vmem:[#allocation9 + $0x48] sm:$0xff]
    %v144 = vld [vmem:[#allocation9 + $0x50] sm:$0xff]
    %v145 = vld [vmem:[#allocation9 + $0x58] sm:$0xff]
    %v146 = vld [vmem:[#allocation9 + $0x60] sm:$0xff]
    %v147 = vld [vmem:[#allocation9 + $0x68] sm:$0xff]
    %v148 = vld [vmem:[#allocation9 + $0x70] sm:$0xff]
    %v149 = vld [vmem:[#allocation9 + $0x78] sm:$0xff]
    %v150 = vld [vmem:[%s3] sm:$0x1]
    %v151 = vld [vmem:[#allocation4] sm:$0xff]
    %v152 = vld [vmem:[#allocation4 + $0x8] sm:$0xff]
    %v153 = vld [vmem:[#allocation4 + $0x10] sm:$0xff]
    %v154 = vld [vmem:[#allocation4 + $0x18] sm:$0xff]
    %v155 = vld [vmem:[#allocation4 + $0x20] sm:$0xff]
    %v156 = vld [vmem:[#allocation4 + $0x28] sm:$0xff]
    %v157 = vld [vmem:[#allocation4 + $0x30] sm:$0xff]
    %v158 = vld [vmem:[#allocation4 + $0x38] sm:$0xff]
    %v160 = vlaneseq
    %v161 = vshrl.u32 %v160, 7
    %v162 = vsub.s32 0, %v161
    %v163 = vrot.slane %v150, %v162
    %165 = vmatprep.subr.mxu0 0.0
    %166 = vmatpush1.msra.mxu0 %v133
    %167 = vmatprep.subr.mxu0 0.0
    %168 = vmatpush1.msra.mxu0 %v132
    %169 = vmatprep.subr.mxu0 0.0
    %170 = vmatpush1.msra.mxu0 %v131
    %171 = vmatprep.subr.mxu0 0.0
    %172 = vmatpush1.msra.mxu0 %v130
    %173 = vmatprep.subr.mxu0 0.0
    %174 = vmatpush1.msra.mxu0 %v129
    %175 = vmatprep.subr.mxu0 0.0
    %176 = vmatpush1.msra.mxu0 %v128
    %177 = vmatprep.subr.mxu0 0.0
    %178 = vmatpush1.msra.mxu0 %v127
    %179 = vmatprep.subr.mxu0 0.0
    %180 = vmatpush1.msra.mxu0 %v126
    %181 = vmatprep.subr.mxu0 0.0
    %182 = vmatpush1.msra.mxu0 %v125
    %183 = vmatprep.subr.mxu0 0.0
    %184 = vmatpush1.msra.mxu0 %v124
    %185 = vmatprep.subr.mxu0 0.0
    %186 = vmatpush1.msra.mxu0 %v123
    %187 = vmatprep.subr.mxu0 0.0
    %188 = vmatpush1.msra.mxu0 %v122
    %189 = vmatprep.subr.mxu0 0.0
    %190 = vmatpush1.msra.mxu0 %v121
    %191 = vmatprep.subr.mxu0 0.0
    %192 = vmatpush1.msra.mxu0 %v120
    %193 = vmatprep.subr.mxu0 0.0
    %194 = vmatpush1.msra.mxu0 %v119
    %195 = vmatprep.subr.mxu0 0.0
    %196 = vmatpush1.msra.mxu0 %v118
    %197 = vmatprep.subr.mxu0 0.0
    %198 = vmatpush2.msra.mxu0 0.0
    %199 = vmatprep.subr.mxu0 0.0
    %200 = vmatpush2.msra.mxu0 0.0
    %201 = vmatprep.subr.mxu0 0.0
    %202 = vmatpush2.msra.mxu0 0.0
    %203 = vmatprep.subr.mxu0 0.0
    %204 = vmatpush2.msra.mxu0 0.0
    %205 = vmatprep.subr.mxu0 0.0
    %206 = vmatpush2.msra.mxu0 0.0
    %207 = vmatprep.subr.mxu0 0.0
    %208 = vmatpush2.msra.mxu0 0.0
    %209 = vmatprep.subr.mxu0 0.0
    %210 = vmatpush2.msra.mxu0 0.0
    %211 = vmatprep.subr.mxu0 0.0
    %212 = vmatpush2.msra.mxu0 0.0
    %213 = vmatprep.subr.mxu0 0.0
    %214 = vmatpush2.msra.mxu0 0.0
    %215 = vmatprep.subr.mxu0 0.0
    %216 = vmatpush2.msra.mxu0 0.0
    %217 = vmatprep.subr.mxu0 0.0
    %218 = vmatpush2.msra.mxu0 0.0
    %219 = vmatprep.subr.mxu0 0.0
    %220 = vmatpush2.msra.mxu0 0.0
    %221 = vmatprep.subr.mxu0 0.0
    %222 = vmatpush2.msra.mxu0 0.0
    %223 = vmatprep.subr.mxu0 0.0
    %224 = vmatpush2.msra.mxu0 0.0
    %225 = vmatprep.subr.mxu0 0.0
    %226 = vmatpush2.msra.mxu0 0.0
    %227 = vmatprep.subr.mxu0 0.0
    %228 = vmatpush2.msra.mxu0 0.0
    %229 = vmatprep.mubr.f32.mxu0 0.0
    %230 = vmatmul.mubr.f32.gmra.mxu0 %v151
    %v231 = vpop.f32.mrf.mxu0
    %v232 = vadd.f32 %v163, %v231
    %v233 = vpop.f32.mrf.mxu0
    %234 = vmatprep.mubr.f32.mxu0 0.0
    %235 = vmatmul.mubr.f32.gmra.mxu0 %v152
    %v236 = vpop.f32.mrf.mxu0
    %v237 = vadd.f32 %v163, %v236
    %v238 = vpop.f32.mrf.mxu0
    %239 = vmatprep.mubr.f32.mxu0 0.0
    %240 = vmatmul.mubr.f32.gmra.mxu0 %v153
    %v241 = vpop.f32.mrf.mxu0
    %v242 = vadd.f32 %v163, %v241
    %v243 = vpop.f32.mrf.mxu0
    %244 = vmatprep.mubr.f32.mxu0 0.0
    %245 = vmatmul.mubr.f32.gmra.mxu0 %v154
    %v246 = vpop.f32.mrf.mxu0
    %v247 = vadd.f32 %v163, %v246
    %v248 = vpop.f32.mrf.mxu0
    %249 = vmatprep.mubr.f32.mxu0 0.0
    %250 = vmatmul.mubr.f32.gmra.mxu0 %v155
    %v251 = vpop.f32.mrf.mxu0
    %v252 = vadd.f32 %v163, %v251
    %v253 = vpop.f32.mrf.mxu0
    %254 = vmatprep.mubr.f32.mxu0 0.0
    %255 = vmatmul.mubr.f32.gmra.mxu0 %v156
    %v256 = vpop.f32.mrf.mxu0
    %v257 = vadd.f32 %v163, %v256
    %v258 = vpop.f32.mrf.mxu0
    %259 = vmatprep.mubr.f32.mxu0 0.0
    %260 = vmatmul.mubr.f32.gmra.mxu0 %v157
    %v261 = vpop.f32.mrf.mxu0
    %v262 = vadd.f32 %v163, %v261
    %v263 = vpop.f32.mrf.mxu0
    %264 = vmatprep.mubr.f32.mxu0 0.0
    %265 = vmatmul.mubr.f32.gmra.mxu0 %v158
    %v266 = vpop.f32.mrf.mxu0
    %v267 = vadd.f32 %v163, %v266
    %v268 = vpop.f32.mrf.mxu0
    %269 = vdwg.mxu0
    %270 = vst [vmem:[#allocation2] sm:$0xff] %v232
    %271 = vst [vmem:[#allocation2 + $0x8] sm:$0xff] %v237
    %272 = vst [vmem:[#allocation2 + $0x10] sm:$0xff] %v242
    %273 = vst [vmem:[#allocation2 + $0x18] sm:$0xff] %v247
    %274 = vst [vmem:[#allocation2 + $0x20] sm:$0xff] %v252
    %275 = vst [vmem:[#allocation2 + $0x28] sm:$0xff] %v257
    %276 = vst [vmem:[#allocation2 + $0x30] sm:$0xff] %v262
    %277 = vst [vmem:[#allocation2 + $0x38] sm:$0xff] %v267
    %v278 = vld [vmem:[#allocation2] sm:$0xff]
    %279 = vmatprep.subr.mxu0 0.0
    %280 = vmatpush1.msra.mxu0 %v149
    %281 = vmatprep.subr.mxu0 0.0
    %282 = vmatpush1.msra.mxu0 %v148
    %283 = vmatprep.subr.mxu0 0.0
    %284 = vmatpush1.msra.mxu0 %v147
    %285 = vmatprep.subr.mxu0 0.0
    %286 = vmatpush1.msra.mxu0 %v146
    %287 = vmatprep.subr.mxu0 0.0
    %288 = vmatpush1.msra.mxu0 %v145
    %289 = vmatprep.subr.mxu0 0.0
    %290 = vmatpush1.msra.mxu0 %v144
    %291 = vmatprep.subr.mxu0 0.0
    %292 = vmatpush1.msra.mxu0 %v143
    %293 = vmatprep.subr.mxu0 0.0
    %294 = vmatpush1.msra.mxu0 %v142
    %295 = vmatprep.subr.mxu0 0.0
    %296 = vmatpush1.msra.mxu0 %v141
    %297 = vmatprep.subr.mxu0 0.0
    %298 = vmatpush1.msra.mxu0 %v140
    %299 = vmatprep.subr.mxu0 0.0
    %300 = vmatpush1.msra.mxu0 %v139
    %301 = vmatprep.subr.mxu0 0.0
    %302 = vmatpush1.msra.mxu0 %v138
    %303 = vmatprep.subr.mxu0 0.0
    %304 = vmatpush1.msra.mxu0 %v137
    %305 = vmatprep.subr.mxu0 0.0
    %306 = vmatpush1.msra.mxu0 %v136
    %307 = vmatprep.subr.mxu0 0.0
    %308 = vmatpush1.msra.mxu0 %v135
    %309 = vmatprep.subr.mxu0 0.0
    %310 = vmatpush1.msra.mxu0 %v134
    %311 = vmatprep.subr.mxu0 0.0
    %312 = vmatpush2.msra.mxu0 0.0
    %313 = vmatprep.subr.mxu0 0.0
    %314 = vmatpush2.msra.mxu0 0.0
    %315 = vmatprep.subr.mxu0 0.0
    %316 = vmatpush2.msra.mxu0 0.0
    %317 = vmatprep.subr.mxu0 0.0
    %318 = vmatpush2.msra.mxu0 0.0
    %319 = vmatprep.subr.mxu0 0.0
    %320 = vmatpush2.msra.mxu0 0.0
    %321 = vmatprep.subr.mxu0 0.0
    %322 = vmatpush2.msra.mxu0 0.0
    %323 = vmatprep.subr.mxu0 0.0
    %324 = vmatpush2.msra.mxu0 0.0
    %325 = vmatprep.subr.mxu0 0.0
    %326 = vmatpush2.msra.mxu0 0.0
    %327 = vmatprep.subr.mxu0 0.0
    %328 = vmatpush2.msra.mxu0 0.0
    %329 = vmatprep.subr.mxu0 0.0
    %330 = vmatpush2.msra.mxu0 0.0
    %331 = vmatprep.subr.mxu0 0.0
    %332 = vmatpush2.msra.mxu0 0.0
    %333 = vmatprep.subr.mxu0 0.0
    %334 = vmatpush2.msra.mxu0 0.0
    %335 = vmatprep.subr.mxu0 0.0
    %336 = vmatpush2.msra.mxu0 0.0
    %337 = vmatprep.subr.mxu0 0.0
    %338 = vmatpush2.msra.mxu0 0.0
    %339 = vmatprep.subr.mxu0 0.0
    %340 = vmatpush2.msra.mxu0 0.0
    %341 = vmatprep.subr.mxu0 0.0
    %342 = vmatpush2.msra.mxu0 0.0
    %343 = vmatprep.mubr.f32.mxu0 0.0
    %344 = vmatmul.mubr.f32.gmra.mxu0 0.0
    %v345 = vpop.f32.mrf.mxu0
    %v346 = vadd.f32 0.0, %v345
    %v347 = vpop.f32.mrf.mxu0
    %348 = vdwg.mxu0
    %v349 = vadd.f32 %v278, %v346
    %v350 = vtanh.pop %v349
    %351 = vst [vmem:[#allocation2] sm:$0xff] %v350
    %v352 = vld [vmem:[#allocation2 + $0x8] sm:$0xff]
    %353 = vmatprep.subr.mxu0 0.0
    %354 = vmatpush1.msra.mxu0 %v149
    %355 = vmatprep.subr.mxu0 0.0
    %356 = vmatpush1.msra.mxu0 %v148
    %357 = vmatprep.subr.mxu0 0.0
    %358 = vmatpush1.msra.mxu0 %v147
    %359 = vmatprep.subr.mxu0 0.0
    %360 = vmatpush1.msra.mxu0 %v146
    %361 = vmatprep.subr.mxu0 0.0
    %362 = vmatpush1.msra.mxu0 %v145
    %363 = vmatprep.subr.mxu0 0.0
    %364 = vmatpush1.msra.mxu0 %v144
    %365 = vmatprep.subr.mxu0 0.0
    %366 = vmatpush1.msra.mxu0 %v143
    %367 = vmatprep.subr.mxu0 0.0
    %368 = vmatpush1.msra.mxu0 %v142
    %369 = vmatprep.subr.mxu0 0.0
    %370 = vmatpush1.msra.mxu0 %v141
    %371 = vmatprep.subr.mxu0 0.0
    %372 = vmatpush1.msra.mxu0 %v140
    %373 = vmatprep.subr.mxu0 0.0
    %374 = vmatpush1.msra.mxu0 %v139
    %375 = vmatprep.subr.mxu0 0.0
    %376 = vmatpush1.msra.mxu0 %v138
    %377 = vmatprep.subr.mxu0 0.0
    %378 = vmatpush1.msra.mxu0 %v137
    %379 = vmatprep.subr.mxu0 0.0
    %380 = vmatpush1.msra.mxu0 %v136
    %381 = vmatprep.subr.mxu0 0.0
    %382 = vmatpush1.msra.mxu0 %v135
    %383 = vmatprep.subr.mxu0 0.0
    %384 = vmatpush1.msra.mxu0 %v134
    %385 = vmatprep.subr.mxu0 0.0
    %386 = vmatpush2.msra.mxu0 0.0
    %387 = vmatprep.subr.mxu0 0.0
    %388 = vmatpush2.msra.mxu0 0.0
    %389 = vmatprep.subr.mxu0 0.0
    %390 = vmatpush2.msra.mxu0 0.0
    %391 = vmatprep.subr.mxu0 0.0
    %392 = vmatpush2.msra.mxu0 0.0
    %393 = vmatprep.subr.mxu0 0.0
    %394 = vmatpush2.msra.mxu0 0.0
    %395 = vmatprep.subr.mxu0 0.0
    %396 = vmatpush2.msra.mxu0 0.0
    %397 = vmatprep.subr.mxu0 0.0
    %398 = vmatpush2.msra.mxu0 0.0
    %399 = vmatprep.subr.mxu0 0.0
    %400 = vmatpush2.msra.mxu0 0.0
    %401 = vmatprep.subr.mxu0 0.0
    %402 = vmatpush2.msra.mxu0 0.0
    %403 = vmatprep.subr.mxu0 0.0
    %404 = vmatpush2.msra.mxu0 0.0
    %405 = vmatprep.subr.mxu0 0.0
    %406 = vmatpush2.msra.mxu0 0.0
    %407 = vmatprep.subr.mxu0 0.0
    %408 = vmatpush2.msra.mxu0 0.0
    %409 = vmatprep.subr.mxu0 0.0
    %410 = vmatpush2.msra.mxu0 0.0
    %411 = vmatprep.subr.mxu0 0.0
    %412 = vmatpush2.msra.mxu0 0.0
    %413 = vmatprep.subr.mxu0 0.0
    %414 = vmatpush2.msra.mxu0 0.0
    %415 = vmatprep.subr.mxu0 0.0
    %416 = vmatpush2.msra.mxu0 0.0
    %417 = vmatprep.mubr.f32.mxu0 0.0
    %418 = vmatmul.mubr.f32.gmra.mxu0 %v350
    %v419 = vpop.f32.mrf.mxu0
    %v420 = vadd.f32 0.0, %v419
    %v421 = vpop.f32.mrf.mxu0
    %422 = vdwg.mxu0
    %v423 = vadd.f32 %v352, %v420
    %v424 = vtanh.pop %v423
    %425 = vst [vmem:[#allocation2 + $0x8] sm:$0xff] %v424
    %v426 = vld [vmem:[#allocation2 + $0x10] sm:$0xff]
    %427 = vmatprep.subr.mxu0 0.0
    %428 = vmatpush1.msra.mxu0 %v149
    %429 = vmatprep.subr.mxu0 0.0
    %430 = vmatpush1.msra.mxu0 %v148
    %431 = vmatprep.subr.mxu0 0.0
    %432 = vmatpush1.msra.mxu0 %v147
    %433 = vmatprep.subr.mxu0 0.0
    %434 = vmatpush1.msra.mxu0 %v146
    %435 = vmatprep.subr.mxu0 0.0
    %436 = vmatpush1.msra.mxu0 %v145
    %437 = vmatprep.subr.mxu0 0.0
    %438 = vmatpush1.msra.mxu0 %v144
    %439 = vmatprep.subr.mxu0 0.0
    %440 = vmatpush1.msra.mxu0 %v143
    %441 = vmatprep.subr.mxu0 0.0
    %442 = vmatpush1.msra.mxu0 %v142
    %443 = vmatprep.subr.mxu0 0.0
    %444 = vmatpush1.msra.mxu0 %v141
    %445 = vmatprep.subr.mxu0 0.0
    %446 = vmatpush1.msra.mxu0 %v140
    %447 = vmatprep.subr.mxu0 0.0
    %448 = vmatpush1.msra.mxu0 %v139
    %449 = vmatprep.subr.mxu0 0.0
    %450 = vmatpush1.msra.mxu0 %v138
    %451 = vmatprep.subr.mxu0 0.0
    %452 = vmatpush1.msra.mxu0 %v137
    %453 = vmatprep.subr.mxu0 0.0
    %454 = vmatpush1.msra.mxu0 %v136
    %455 = vmatprep.subr.mxu0 0.0
    %456 = vmatpush1.msra.mxu0 %v135
    %457 = vmatprep.subr.mxu0 0.0
    %458 = vmatpush1.msra.mxu0 %v134
    %459 = vmatprep.subr.mxu0 0.0
    %460 = vmatpush2.msra.mxu0 0.0
    %461 = vmatprep.subr.mxu0 0.0
    %462 = vmatpush2.msra.mxu0 0.0
    %463 = vmatprep.subr.mxu0 0.0
    %464 = vmatpush2.msra.mxu0 0.0
    %465 = vmatprep.subr.mxu0 0.0
    %466 = vmatpush2.msra.mxu0 0.0
    %467 = vmatprep.subr.mxu0 0.0
    %468 = vmatpush2.msra.mxu0 0.0
    %469 = vmatprep.subr.mxu0 0.0
    %470 = vmatpush2.msra.mxu0 0.0
    %471 = vmatprep.subr.mxu0 0.0
    %472 = vmatpush2.msra.mxu0 0.0
    %473 = vmatprep.subr.mxu0 0.0
    %474 = vmatpush2.msra.mxu0 0.0
    %475 = vmatprep.subr.mxu0 0.0
    %476 = vmatpush2.msra.mxu0 0.0
    %477 = vmatprep.subr.mxu0 0.0
    %478 = vmatpush2.msra.mxu0 0.0
    %479 = vmatprep.subr.mxu0 0.0
    %480 = vmatpush2.msra.mxu0 0.0
    %481 = vmatprep.subr.mxu0 0.0
    %482 = vmatpush2.msra.mxu0 0.0
    %483 = vmatprep.subr.mxu0 0.0
    %484 = vmatpush2.msra.mxu0 0.0
    %485 = vmatprep.subr.mxu0 0.0
    %486 = vmatpush2.msra.mxu0 0.0
    %487 = vmatprep.subr.mxu0 0.0
    %488 = vmatpush2.msra.mxu0 0.0
    %489 = vmatprep.subr.mxu0 0.0
    %490 = vmatpush2.msra.mxu0 0.0
    %491 = vmatprep.mubr.f32.mxu0 0.0
    %492 = vmatmul.mubr.f32.gmra.mxu0 %v424
    %v493 = vpop.f32.mrf.mxu0
    %v494 = vadd.f32 0.0, %v493
    %v495 = vpop.f32.mrf.mxu0
    %496 = vdwg.mxu0
    %v497 = vadd.f32 %v426, %v494
    %v498 = vtanh.pop %v497
    %499 = vst [vmem:[#allocation2 + $0x10] sm:$0xff] %v498
    %v500 = vld [vmem:[#allocation2 + $0x18] sm:$0xff]
    %501 = vmatprep.subr.mxu0 0.0
    %502 = vmatpush1.msra.mxu0 %v149
    %503 = vmatprep.subr.mxu0 0.0
    %504 = vmatpush1.msra.mxu0 %v148
    %505 = vmatprep.subr.mxu0 0.0
    %506 = vmatpush1.msra.mxu0 %v147
    %507 = vmatprep.subr.mxu0 0.0
    %508 = vmatpush1.msra.mxu0 %v146
    %509 = vmatprep.subr.mxu0 0.0
    %510 = vmatpush1.msra.mxu0 %v145
    %511 = vmatprep.subr.mxu0 0.0
    %512 = vmatpush1.msra.mxu0 %v144
    %513 = vmatprep.subr.mxu0 0.0
    %514 = vmatpush1.msra.mxu0 %v143
    %515 = vmatprep.subr.mxu0 0.0
    %516 = vmatpush1.msra.mxu0 %v142
    %517 = vmatprep.subr.mxu0 0.0
    %518 = vmatpush1.msra.mxu0 %v141
    %519 = vmatprep.subr.mxu0 0.0
    %520 = vmatpush1.msra.mxu0 %v140
    %521 = vmatprep.subr.mxu0 0.0
    %522 = vmatpush1.msra.mxu0 %v139
    %523 = vmatprep.subr.mxu0 0.0
    %524 = vmatpush1.msra.mxu0 %v138
    %525 = vmatprep.subr.mxu0 0.0
    %526 = vmatpush1.msra.mxu0 %v137
    %527 = vmatprep.subr.mxu0 0.0
    %528 = vmatpush1.msra.mxu0 %v136
    %529 = vmatprep.subr.mxu0 0.0
    %530 = vmatpush1.msra.mxu0 %v135
    %531 = vmatprep.subr.mxu0 0.0
    %532 = vmatpush1.msra.mxu0 %v134
    %533 = vmatprep.subr.mxu0 0.0
    %534 = vmatpush2.msra.mxu0 0.0
    %535 = vmatprep.subr.mxu0 0.0
    %536 = vmatpush2.msra.mxu0 0.0
    %537 = vmatprep.subr.mxu0 0.0
    %538 = vmatpush2.msra.mxu0 0.0
    %539 = vmatprep.subr.mxu0 0.0
    %540 = vmatpush2.msra.mxu0 0.0
    %541 = vmatprep.subr.mxu0 0.0
    %542 = vmatpush2.msra.mxu0 0.0
    %543 = vmatprep.subr.mxu0 0.0
    %544 = vmatpush2.msra.mxu0 0.0
    %545 = vmatprep.subr.mxu0 0.0
    %546 = vmatpush2.msra.mxu0 0.0
    %547 = vmatprep.subr.mxu0 0.0
    %548 = vmatpush2.msra.mxu0 0.0
    %549 = vmatprep.subr.mxu0 0.0
    %550 = vmatpush2.msra.mxu0 0.0
    %551 = vmatprep.subr.mxu0 0.0
    %552 = vmatpush2.msra.mxu0 0.0
    %553 = vmatprep.subr.mxu0 0.0
    %554 = vmatpush2.msra.mxu0 0.0
    %555 = vmatprep.subr.mxu0 0.0
    %556 = vmatpush2.msra.mxu0 0.0
    %557 = vmatprep.subr.mxu0 0.0
    %558 = vmatpush2.msra.mxu0 0.0
    %559 = vmatprep.subr.mxu0 0.0
    %560 = vmatpush2.msra.mxu0 0.0
    %561 = vmatprep.subr.mxu0 0.0
    %562 = vmatpush2.msra.mxu0 0.0
    %563 = vmatprep.subr.mxu0 0.0
    %564 = vmatpush2.msra.mxu0 0.0
    %565 = vmatprep.mubr.f32.mxu0 0.0
    %566 = vmatmul.mubr.f32.gmra.mxu0 %v498
    %v567 = vpop.f32.mrf.mxu0
    %v568 = vadd.f32 0.0, %v567
    %v569 = vpop.f32.mrf.mxu0
    %570 = vdwg.mxu0
    %v571 = vadd.f32 %v500, %v568
    %v572 = vtanh.pop %v571
    %573 = vst [vmem:[#allocation2 + $0x18] sm:$0xff] %v572
    %v574 = vld [vmem:[#allocation2 + $0x20] sm:$0xff]
    %575 = vmatprep.subr.mxu0 0.0
    %576 = vmatpush1.msra.mxu0 %v149
    %577 = vmatprep.subr.mxu0 0.0
    %578 = vmatpush1.msra.mxu0 %v148
    %579 = vmatprep.subr.mxu0 0.0
    %580 = vmatpush1.msra.mxu0 %v147
    %581 = vmatprep.subr.mxu0 0.0
    %582 = vmatpush1.msra.mxu0 %v146
    %583 = vmatprep.subr.mxu0 0.0
    %584 = vmatpush1.msra.mxu0 %v145
    %585 = vmatprep.subr.mxu0 0.0
    %586 = vmatpush1.msra.mxu0 %v144
    %587 = vmatprep.subr.mxu0 0.0
    %588 = vmatpush1.msra.mxu0 %v143
    %589 = vmatprep.subr.mxu0 0.0
    %590 = vmatpush1.msra.mxu0 %v142
    %591 = vmatprep.subr.mxu0 0.0
    %592 = vmatpush1.msra.mxu0 %v141
    %593 = vmatprep.subr.mxu0 0.0
    %594 = vmatpush1.msra.mxu0 %v140
    %595 = vmatprep.subr.mxu0 0.0
    %596 = vmatpush1.msra.mxu0 %v139
    %597 = vmatprep.subr.mxu0 0.0
    %598 = vmatpush1.msra.mxu0 %v138
    %599 = vmatprep.subr.mxu0 0.0
    %600 = vmatpush1.msra.mxu0 %v137
    %601 = vmatprep.subr.mxu0 0.0
    %602 = vmatpush1.msra.mxu0 %v136
    %603 = vmatprep.subr.mxu0 0.0
    %604 = vmatpush1.msra.mxu0 %v135
    %605 = vmatprep.subr.mxu0 0.0
    %606 = vmatpush1.msra.mxu0 %v134
    %607 = vmatprep.subr.mxu0 0.0
    %608 = vmatpush2.msra.mxu0 0.0
    %609 = vmatprep.subr.mxu0 0.0
    %610 = vmatpush2.msra.mxu0 0.0
    %611 = vmatprep.subr.mxu0 0.0
    %612 = vmatpush2.msra.mxu0 0.0
    %613 = vmatprep.subr.mxu0 0.0
    %614 = vmatpush2.msra.mxu0 0.0
    %615 = vmatprep.subr.mxu0 0.0
    %616 = vmatpush2.msra.mxu0 0.0
    %617 = vmatprep.subr.mxu0 0.0
    %618 = vmatpush2.msra.mxu0 0.0
    %619 = vmatprep.subr.mxu0 0.0
    %620 = vmatpush2.msra.mxu0 0.0
    %621 = vmatprep.subr.mxu0 0.0
    %622 = vmatpush2.msra.mxu0 0.0
    %623 = vmatprep.subr.mxu0 0.0
    %624 = vmatpush2.msra.mxu0 0.0
    %625 = vmatprep.subr.mxu0 0.0
    %626 = vmatpush2.msra.mxu0 0.0
    %627 = vmatprep.subr.mxu0 0.0
    %628 = vmatpush2.msra.mxu0 0.0
    %629 = vmatprep.subr.mxu0 0.0
    %630 = vmatpush2.msra.mxu0 0.0
    %631 = vmatprep.subr.mxu0 0.0
    %632 = vmatpush2.msra.mxu0 0.0
    %633 = vmatprep.subr.mxu0 0.0
    %634 = vmatpush2.msra.mxu0 0.0
    %635 = vmatprep.subr.mxu0 0.0
    %636 = vmatpush2.msra.mxu0 0.0
    %637 = vmatprep.subr.mxu0 0.0
    %638 = vmatpush2.msra.mxu0 0.0
    %639 = vmatprep.mubr.f32.mxu0 0.0
    %640 = vmatmul.mubr.f32.gmra.mxu0 %v572
    %v641 = vpop.f32.mrf.mxu0
    %v642 = vadd.f32 0.0, %v641
    %v643 = vpop.f32.mrf.mxu0
    %644 = vdwg.mxu0
    %v645 = vadd.f32 %v574, %v642
    %v646 = vtanh.pop %v645
    %647 = vst [vmem:[#allocation2 + $0x20] sm:$0xff] %v646
    %v648 = vld [vmem:[#allocation2 + $0x28] sm:$0xff]
    %649 = vmatprep.subr.mxu0 0.0
    %650 = vmatpush1.msra.mxu0 %v149
    %651 = vmatprep.subr.mxu0 0.0
    %652 = vmatpush1.msra.mxu0 %v148
    %653 = vmatprep.subr.mxu0 0.0
    %654 = vmatpush1.msra.mxu0 %v147
    %655 = vmatprep.subr.mxu0 0.0
    %656 = vmatpush1.msra.mxu0 %v146
    %657 = vmatprep.subr.mxu0 0.0
    %658 = vmatpush1.msra.mxu0 %v145
    %659 = vmatprep.subr.mxu0 0.0
    %660 = vmatpush1.msra.mxu0 %v144
    %661 = vmatprep.subr.mxu0 0.0
    %662 = vmatpush1.msra.mxu0 %v143
    %663 = vmatprep.subr.mxu0 0.0
    %664 = vmatpush1.msra.mxu0 %v142
    %665 = vmatprep.subr.mxu0 0.0
    %666 = vmatpush1.msra.mxu0 %v141
    %667 = vmatprep.subr.mxu0 0.0
    %668 = vmatpush1.msra.mxu0 %v140
    %669 = vmatprep.subr.mxu0 0.0
    %670 = vmatpush1.msra.mxu0 %v139
    %671 = vmatprep.subr.mxu0 0.0
    %672 = vmatpush1.msra.mxu0 %v138
    %673 = vmatprep.subr.mxu0 0.0
    %674 = vmatpush1.msra.mxu0 %v137
    %675 = vmatprep.subr.mxu0 0.0
    %676 = vmatpush1.msra.mxu0 %v136
    %677 = vmatprep.subr.mxu0 0.0
    %678 = vmatpush1.msra.mxu0 %v135
    %679 = vmatprep.subr.mxu0 0.0
    %680 = vmatpush1.msra.mxu0 %v134
    %681 = vmatprep.subr.mxu0 0.0
    %682 = vmatpush2.msra.mxu0 0.0
    %683 = vmatprep.subr.mxu0 0.0
    %684 = vmatpush2.msra.mxu0 0.0
    %685 = vmatprep.subr.mxu0 0.0
    %686 = vmatpush2.msra.mxu0 0.0
    %687 = vmatprep.subr.mxu0 0.0
    %688 = vmatpush2.msra.mxu0 0.0
    %689 = vmatprep.subr.mxu0 0.0
    %690 = vmatpush2.msra.mxu0 0.0
    %691 = vmatprep.subr.mxu0 0.0
    %692 = vmatpush2.msra.mxu0 0.0
    %693 = vmatprep.subr.mxu0 0.0
    %694 = vmatpush2.msra.mxu0 0.0
    %695 = vmatprep.subr.mxu0 0.0
    %696 = vmatpush2.msra.mxu0 0.0
    %697 = vmatprep.subr.mxu0 0.0
    %698 = vmatpush2.msra.mxu0 0.0
    %699 = vmatprep.subr.mxu0 0.0
    %700 = vmatpush2.msra.mxu0 0.0
    %701 = vmatprep.subr.mxu0 0.0
    %702 = vmatpush2.msra.mxu0 0.0
    %703 = vmatprep.subr.mxu0 0.0
    %704 = vmatpush2.msra.mxu0 0.0
    %705 = vmatprep.subr.mxu0 0.0
    %706 = vmatpush2.msra.mxu0 0.0
    %707 = vmatprep.subr.mxu0 0.0
    %708 = vmatpush2.msra.mxu0 0.0
    %709 = vmatprep.subr.mxu0 0.0
    %710 = vmatpush2.msra.mxu0 0.0
    %711 = vmatprep.subr.mxu0 0.0
    %712 = vmatpush2.msra.mxu0 0.0
    %713 = vmatprep.mubr.f32.mxu0 0.0
    %714 = vmatmul.mubr.f32.gmra.mxu0 %v646
    %v715 = vpop.f32.mrf.mxu0
    %v716 = vadd.f32 0.0, %v715
    %v717 = vpop.f32.mrf.mxu0
    %718 = vdwg.mxu0
    %v719 = vadd.f32 %v648, %v716
    %v720 = vtanh.pop %v719
    %721 = vst [vmem:[#allocation2 + $0x28] sm:$0xff] %v720
    %v722 = vld [vmem:[#allocation2 + $0x30] sm:$0xff]
    %723 = vmatprep.subr.mxu0 0.0
    %724 = vmatpush1.msra.mxu0 %v149
    %725 = vmatprep.subr.mxu0 0.0
    %726 = vmatpush1.msra.mxu0 %v148
    %727 = vmatprep.subr.mxu0 0.0
    %728 = vmatpush1.msra.mxu0 %v147
    %729 = vmatprep.subr.mxu0 0.0
    %730 = vmatpush1.msra.mxu0 %v146
    %731 = vmatprep.subr.mxu0 0.0
    %732 = vmatpush1.msra.mxu0 %v145
    %733 = vmatprep.subr.mxu0 0.0
    %734 = vmatpush1.msra.mxu0 %v144
    %735 = vmatprep.subr.mxu0 0.0
    %736 = vmatpush1.msra.mxu0 %v143
    %737 = vmatprep.subr.mxu0 0.0
    %738 = vmatpush1.msra.mxu0 %v142
    %739 = vmatprep.subr.mxu0 0.0
    %740 = vmatpush1.msra.mxu0 %v141
    %741 = vmatprep.subr.mxu0 0.0
    %742 = vmatpush1.msra.mxu0 %v140
    %743 = vmatprep.subr.mxu0 0.0
    %744 = vmatpush1.msra.mxu0 %v139
    %745 = vmatprep.subr.mxu0 0.0
    %746 = vmatpush1.msra.mxu0 %v138
    %747 = vmatprep.subr.mxu0 0.0
    %748 = vmatpush1.msra.mxu0 %v137
    %749 = vmatprep.subr.mxu0 0.0
    %750 = vmatpush1.msra.mxu0 %v136
    %751 = vmatprep.subr.mxu0 0.0
    %752 = vmatpush1.msra.mxu0 %v135
    %753 = vmatprep.subr.mxu0 0.0
    %754 = vmatpush1.msra.mxu0 %v134
    %755 = vmatprep.subr.mxu0 0.0
    %756 = vmatpush2.msra.mxu0 0.0
    %757 = vmatprep.subr.mxu0 0.0
    %758 = vmatpush2.msra.mxu0 0.0
    %759 = vmatprep.subr.mxu0 0.0
    %760 = vmatpush2.msra.mxu0 0.0
    %761 = vmatprep.subr.mxu0 0.0
    %762 = vmatpush2.msra.mxu0 0.0
    %763 = vmatprep.subr.mxu0 0.0
    %764 = vmatpush2.msra.mxu0 0.0
    %765 = vmatprep.subr.mxu0 0.0
    %766 = vmatpush2.msra.mxu0 0.0
    %767 = vmatprep.subr.mxu0 0.0
    %768 = vmatpush2.msra.mxu0 0.0
    %769 = vmatprep.subr.mxu0 0.0
    %770 = vmatpush2.msra.mxu0 0.0
    %771 = vmatprep.subr.mxu0 0.0
    %772 = vmatpush2.msra.mxu0 0.0
    %773 = vmatprep.subr.mxu0 0.0
    %774 = vmatpush2.msra.mxu0 0.0
    %775 = vmatprep.subr.mxu0 0.0
    %776 = vmatpush2.msra.mxu0 0.0
    %777 = vmatprep.subr.mxu0 0.0
    %778 = vmatpush2.msra.mxu0 0.0
    %779 = vmatprep.subr.mxu0 0.0
    %780 = vmatpush2.msra.mxu0 0.0
    %781 = vmatprep.subr.mxu0 0.0
    %782 = vmatpush2.msra.mxu0 0.0
    %783 = vmatprep.subr.mxu0 0.0
    %784 = vmatpush2.msra.mxu0 0.0
    %785 = vmatprep.subr.mxu0 0.0
    %786 = vmatpush2.msra.mxu0 0.0
    %787 = vmatprep.mubr.f32.mxu0 0.0
    %788 = vmatmul.mubr.f32.gmra.mxu0 %v720
    %v789 = vpop.f32.mrf.mxu0
    %v790 = vadd.f32 0.0, %v789
    %v791 = vpop.f32.mrf.mxu0
    %792 = vdwg.mxu0
    %v793 = vadd.f32 %v722, %v790
    %v794 = vtanh.pop %v793
    %795 = vst [vmem:[#allocation2 + $0x30] sm:$0xff] %v794
    %v796 = vld [vmem:[#allocation2 + $0x38] sm:$0xff]
    %797 = vmatprep.subr.mxu0 0.0
    %798 = vmatpush1.msra.mxu0 %v149
    %799 = vmatprep.subr.mxu0 0.0
    %800 = vmatpush1.msra.mxu0 %v148
    %801 = vmatprep.subr.mxu0 0.0
    %802 = vmatpush1.msra.mxu0 %v147
    %803 = vmatprep.subr.mxu0 0.0
    %804 = vmatpush1.msra.mxu0 %v146
    %805 = vmatprep.subr.mxu0 0.0
    %806 = vmatpush1.msra.mxu0 %v145
    %807 = vmatprep.subr.mxu0 0.0
    %808 = vmatpush1.msra.mxu0 %v144
    %809 = vmatprep.subr.mxu0 0.0
    %810 = vmatpush1.msra.mxu0 %v143
    %811 = vmatprep.subr.mxu0 0.0
    %812 = vmatpush1.msra.mxu0 %v142
    %813 = vmatprep.subr.mxu0 0.0
    %814 = vmatpush1.msra.mxu0 %v141
    %815 = vmatprep.subr.mxu0 0.0
    %816 = vmatpush1.msra.mxu0 %v140
    %817 = vmatprep.subr.mxu0 0.0
    %818 = vmatpush1.msra.mxu0 %v139
    %819 = vmatprep.subr.mxu0 0.0
    %820 = vmatpush1.msra.mxu0 %v138
    %821 = vmatprep.subr.mxu0 0.0
    %822 = vmatpush1.msra.mxu0 %v137
    %823 = vmatprep.subr.mxu0 0.0
    %824 = vmatpush1.msra.mxu0 %v136
    %825 = vmatprep.subr.mxu0 0.0
    %826 = vmatpush1.msra.mxu0 %v135
    %827 = vmatprep.subr.mxu0 0.0
    %828 = vmatpush1.msra.mxu0 %v134
    %829 = vmatprep.subr.mxu0 0.0
    %830 = vmatpush2.msra.mxu0 0.0
    %831 = vmatprep.subr.mxu0 0.0
    %832 = vmatpush2.msra.mxu0 0.0
    %833 = vmatprep.subr.mxu0 0.0
    %834 = vmatpush2.msra.mxu0 0.0
    %835 = vmatprep.subr.mxu0 0.0
    %836 = vmatpush2.msra.mxu0 0.0
    %837 = vmatprep.subr.mxu0 0.0
    %838 = vmatpush2.msra.mxu0 0.0
    %839 = vmatprep.subr.mxu0 0.0
    %840 = vmatpush2.msra.mxu0 0.0
    %841 = vmatprep.subr.mxu0 0.0
    %842 = vmatpush2.msra.mxu0 0.0
    %843 = vmatprep.subr.mxu0 0.0
    %844 = vmatpush2.msra.mxu0 0.0
    %845 = vmatprep.subr.mxu0 0.0
    %846 = vmatpush2.msra.mxu0 0.0
    %847 = vmatprep.subr.mxu0 0.0
    %848 = vmatpush2.msra.mxu0 0.0
    %849 = vmatprep.subr.mxu0 0.0
    %850 = vmatpush2.msra.mxu0 0.0
    %851 = vmatprep.subr.mxu0 0.0
    %852 = vmatpush2.msra.mxu0 0.0
    %853 = vmatprep.subr.mxu0 0.0
    %854 = vmatpush2.msra.mxu0 0.0
    %855 = vmatprep.subr.mxu0 0.0
    %856 = vmatpush2.msra.mxu0 0.0
    %857 = vmatprep.subr.mxu0 0.0
    %858 = vmatpush2.msra.mxu0 0.0
    %859 = vmatprep.subr.mxu0 0.0
    %860 = vmatpush2.msra.mxu0 0.0
    %861 = vmatprep.mubr.f32.mxu0 0.0
    %862 = vmatmul.mubr.f32.gmra.mxu0 %v794
    %v863 = vpop.f32.mrf.mxu0
    %v864 = vadd.f32 0.0, %v863
    %v865 = vpop.f32.mrf.mxu0
    %866 = vdwg.mxu0
    %v867 = vadd.f32 %v796, %v864
    %v868 = vtanh.pop %v867
    %869 = vst [vmem:[#allocation2 + $0x38] sm:$0xff] %v868
    %870 = vst [vmem:[#allocation16] sm:$0xff] %v868
    %v871 = vld [vmem:[#allocation10] sm:$0xff]
    %v872 = vld [vmem:[#allocation10 + $0x8] sm:$0xff]
    %v873 = vld [vmem:[#allocation10 + $0x10] sm:$0xff]
    %v874 = vld [vmem:[#allocation10 + $0x18] sm:$0xff]
    %v875 = vld [vmem:[#allocation10 + $0x20] sm:$0xff]
    %v876 = vld [vmem:[#allocation10 + $0x28] sm:$0xff]
    %v877 = vld [vmem:[#allocation10 + $0x30] sm:$0xff]
    %v878 = vld [vmem:[#allocation10 + $0x38] sm:$0xff]
    %v879 = vld [vmem:[#allocation10 + $0x40] sm:$0xff]
    %v880 = vld [vmem:[#allocation10 + $0x48] sm:$0xff]
    %v881 = vld [vmem:[#allocation10 + $0x50] sm:$0xff]
    %v882 = vld [vmem:[#allocation10 + $0x58] sm:$0xff]
    %v883 = vld [vmem:[#allocation10 + $0x60] sm:$0xff]
    %v884 = vld [vmem:[#allocation10 + $0x68] sm:$0xff]
    %v885 = vld [vmem:[#allocation10 + $0x70] sm:$0xff]
    %v886 = vld [vmem:[#allocation10 + $0x78] sm:$0xff]
    %v887 = vld [vmem:[#allocation12] sm:$0xff]
    %v888 = vld [vmem:[#allocation12 + $0x8] sm:$0xff]
    %v889 = vld [vmem:[#allocation12 + $0x10] sm:$0xff]
    %v890 = vld [vmem:[#allocation12 + $0x18] sm:$0xff]
    %v891 = vld [vmem:[#allocation12 + $0x20] sm:$0xff]
    %v892 = vld [vmem:[#allocation12 + $0x28] sm:$0xff]
    %v893 = vld [vmem:[#allocation12 + $0x30] sm:$0xff]
    %v894 = vld [vmem:[#allocation12 + $0x38] sm:$0xff]
    %v895 = vld [vmem:[#allocation12 + $0x40] sm:$0xff]
    %v896 = vld [vmem:[#allocation12 + $0x48] sm:$0xff]
    %v897 = vld [vmem:[#allocation12 + $0x50] sm:$0xff]
    %v898 = vld [vmem:[#allocation12 + $0x58] sm:$0xff]
    %v899 = vld [vmem:[#allocation12 + $0x60] sm:$0xff]
    %v900 = vld [vmem:[#allocation12 + $0x68] sm:$0xff]
    %v901 = vld [vmem:[#allocation12 + $0x70] sm:$0xff]
    %v902 = vld [vmem:[#allocation12 + $0x78] sm:$0xff]
    %v903 = vld [vmem:[%s6] sm:$0x1]
    %v904 = vld [vmem:[#allocation2] sm:$0xff]
    %v905 = vld [vmem:[#allocation2 + $0x8] sm:$0xff]
    %v906 = vld [vmem:[#allocation2 + $0x10] sm:$0xff]
    %v907 = vld [vmem:[#allocation2 + $0x18] sm:$0xff]
    %v908 = vld [vmem:[#allocation2 + $0x20] sm:$0xff]
    %v909 = vld [vmem:[#allocation2 + $0x28] sm:$0xff]
    %v910 = vld [vmem:[#allocation2 + $0x30] sm:$0xff]
    %v911 = vld [vmem:[#allocation2 + $0x38] sm:$0xff]
    %v913 = vlaneseq
    %v914 = vshrl.u32 %v913, 7
    %v915 = vsub.s32 0, %v914
    %v916 = vrot.slane %v903, %v915
    %918 = vmatprep.subr.mxu0 0.0
    %919 = vmatpush1.msra.mxu0 %v886
    %920 = vmatprep.subr.mxu0 0.0
    %921 = vmatpush1.msra.mxu0 %v885
    %922 = vmatprep.subr.mxu0 0.0
    %923 = vmatpush1.msra.mxu0 %v884
    %924 = vmatprep.subr.mxu0 0.0
    %925 = vmatpush1.msra.mxu0 %v883
    %926 = vmatprep.subr.mxu0 0.0
    %927 = vmatpush1.msra.mxu0 %v882
    %928 = vmatprep.subr.mxu0 0.0
    %929 = vmatpush1.msra.mxu0 %v881
    %930 = vmatprep.subr.mxu0 0.0
    %931 = vmatpush1.msra.mxu0 %v880
    %932 = vmatprep.subr.mxu0 0.0
    %933 = vmatpush1.msra.mxu0 %v879
    %934 = vmatprep.subr.mxu0 0.0
    %935 = vmatpush1.msra.mxu0 %v878
    %936 = vmatprep.subr.mxu0 0.0
    %937 = vmatpush1.msra.mxu0 %v877
    %938 = vmatprep.subr.mxu0 0.0
    %939 = vmatpush1.msra.mxu0 %v876
    %940 = vmatprep.subr.mxu0 0.0
    %941 = vmatpush1.msra.mxu0 %v875
    %942 = vmatprep.subr.mxu0 0.0
    %943 = vmatpush1.msra.mxu0 %v874
    %944 = vmatprep.subr.mxu0 0.0
    %945 = vmatpush1.msra.mxu0 %v873
    %946 = vmatprep.subr.mxu0 0.0
    %947 = vmatpush1.msra.mxu0 %v872
    %948 = vmatprep.subr.mxu0 0.0
    %949 = vmatpush1.msra.mxu0 %v871
    %950 = vmatprep.subr.mxu0 0.0
    %951 = vmatpush2.msra.mxu0 0.0
    %952 = vmatprep.subr.mxu0 0.0
    %953 = vmatpush2.msra.mxu0 0.0
    %954 = vmatprep.subr.mxu0 0.0
    %955 = vmatpush2.msra.mxu0 0.0
    %956 = vmatprep.subr.mxu0 0.0
    %957 = vmatpush2.msra.mxu0 0.0
    %958 = vmatprep.subr.mxu0 0.0
    %959 = vmatpush2.msra.mxu0 0.0
    %960 = vmatprep.subr.mxu0 0.0
    %961 = vmatpush2.msra.mxu0 0.0
    %962 = vmatprep.subr.mxu0 0.0
    %963 = vmatpush2.msra.mxu0 0.0
    %964 = vmatprep.subr.mxu0 0.0
    %965 = vmatpush2.msra.mxu0 0.0
    %966 = vmatprep.subr.mxu0 0.0
    %967 = vmatpush2.msra.mxu0 0.0
    %968 = vmatprep.subr.mxu0 0.0
    %969 = vmatpush2.msra.mxu0 0.0
    %970 = vmatprep.subr.mxu0 0.0
    %971 = vmatpush2.msra.mxu0 0.0
    %972 = vmatprep.subr.mxu0 0.0
    %973 = vmatpush2.msra.mxu0 0.0
    %974 = vmatprep.subr.mxu0 0.0
    %975 = vmatpush2.msra.mxu0 0.0
    %976 = vmatprep.subr.mxu0 0.0
    %977 = vmatpush2.msra.mxu0 0.0
    %978 = vmatprep.subr.mxu0 0.0
    %979 = vmatpush2.msra.mxu0 0.0
    %980 = vmatprep.subr.mxu0 0.0
    %981 = vmatpush2.msra.mxu0 0.0
    %982 = vmatprep.mubr.f32.mxu0 0.0
    %983 = vmatmul.mubr.f32.gmra.mxu0 %v904
    %v984 = vpop.f32.mrf.mxu0
    %v985 = vadd.f32 %v916, %v984
    %v986 = vpop.f32.mrf.mxu0
    %987 = vmatprep.mubr.f32.mxu0 0.0
    %988 = vmatmul.mubr.f32.gmra.mxu0 %v905
    %v989 = vpop.f32.mrf.mxu0
    %v990 = vadd.f32 %v916, %v989
    %v991 = vpop.f32.mrf.mxu0
    %992 = vmatprep.mubr.f32.mxu0 0.0
    %993 = vmatmul.mubr.f32.gmra.mxu0 %v906
    %v994 = vpop.f32.mrf.mxu0
    %v995 = vadd.f32 %v916, %v994
    %v996 = vpop.f32.mrf.mxu0
    %997 = vmatprep.mubr.f32.mxu0 0.0
    %998 = vmatmul.mubr.f32.gmra.mxu0 %v907
    %v999 = vpop.f32.mrf.mxu0
    %v1000 = vadd.f32 %v916, %v999
    %v1001 = vpop.f32.mrf.mxu0
    %1002 = vmatprep.mubr.f32.mxu0 0.0
    %1003 = vmatmul.mubr.f32.gmra.mxu0 %v908
    %v1004 = vpop.f32.mrf.mxu0
    %v1005 = vadd.f32 %v916, %v1004
    %v1006 = vpop.f32.mrf.mxu0
    %1007 = vmatprep.mubr.f32.mxu0 0.0
    %1008 = vmatmul.mubr.f32.gmra.mxu0 %v909
    %v1009 = vpop.f32.mrf.mxu0
    %v1010 = vadd.f32 %v916, %v1009
    %v1011 = vpop.f32.mrf.mxu0
    %1012 = vmatprep.mubr.f32.mxu0 0.0
    %1013 = vmatmul.mubr.f32.gmra.mxu0 %v910
    %v1014 = vpop.f32.mrf.mxu0
    %v1015 = vadd.f32 %v916, %v1014
    %v1016 = vpop.f32.mrf.mxu0
    %1017 = vmatprep.mubr.f32.mxu0 0.0
    %1018 = vmatmul.mubr.f32.gmra.mxu0 %v911
    %v1019 = vpop.f32.mrf.mxu0
    %v1020 = vadd.f32 %v916, %v1019
    %v1021 = vpop.f32.mrf.mxu0
    %1022 = vdwg.mxu0
    %1023 = vst [vmem:[#allocation3] sm:$0xff] %v985
    %1024 = vst [vmem:[#allocation3 + $0x8] sm:$0xff] %v990
    %1025 = vst [vmem:[#allocation3 + $0x10] sm:$0xff] %v995
    %1026 = vst [vmem:[#allocation3 + $0x18] sm:$0xff] %v1000
    %1027 = vst [vmem:[#allocation3 + $0x20] sm:$0xff] %v1005
    %1028 = vst [vmem:[#allocation3 + $0x28] sm:$0xff] %v1010
    %1029 = vst [vmem:[#allocation3 + $0x30] sm:$0xff] %v1015
    %1030 = vst [vmem:[#allocation3 + $0x38] sm:$0xff] %v1020
    %v1031 = vld [vmem:[#allocation3] sm:$0xff]
    %1032 = vmatprep.subr.mxu0 0.0
    %1033 = vmatpush1.msra.mxu0 %v902
    %1034 = vmatprep.subr.mxu0 0.0
    %1035 = vmatpush1.msra.mxu0 %v901
    %1036 = vmatprep.subr.mxu0 0.0
    %1037 = vmatpush1.msra.mxu0 %v900
    %1038 = vmatprep.subr.mxu0 0.0
    %1039 = vmatpush1.msra.mxu0 %v899
    %1040 = vmatprep.subr.mxu0 0.0
    %1041 = vmatpush1.msra.mxu0 %v898
    %1042 = vmatprep.subr.mxu0 0.0
    %1043 = vmatpush1.msra.mxu0 %v897
    %1044 = vmatprep.subr.mxu0 0.0
    %1045 = vmatpush1.msra.mxu0 %v896
    %1046 = vmatprep.subr.mxu0 0.0
    %1047 = vmatpush1.msra.mxu0 %v895
    %1048 = vmatprep.subr.mxu0 0.0
    %1049 = vmatpush1.msra.mxu0 %v894
    %1050 = vmatprep.subr.mxu0 0.0
    %1051 = vmatpush1.msra.mxu0 %v893
    %1052 = vmatprep.subr.mxu0 0.0
    %1053 = vmatpush1.msra.mxu0 %v892
    %1054 = vmatprep.subr.mxu0 0.0
    %1055 = vmatpush1.msra.mxu0 %v891
    %1056 = vmatprep.subr.mxu0 0.0
    %1057 = vmatpush1.msra.mxu0 %v890
    %1058 = vmatprep.subr.mxu0 0.0
    %1059 = vmatpush1.msra.mxu0 %v889
    %1060 = vmatprep.subr.mxu0 0.0
    %1061 = vmatpush1.msra.mxu0 %v888
    %1062 = vmatprep.subr.mxu0 0.0
    %1063 = vmatpush1.msra.mxu0 %v887
    %1064 = vmatprep.subr.mxu0 0.0
    %1065 = vmatpush2.msra.mxu0 0.0
    %1066 = vmatprep.subr.mxu0 0.0
    %1067 = vmatpush2.msra.mxu0 0.0
    %1068 = vmatprep.subr.mxu0 0.0
    %1069 = vmatpush2.msra.mxu0 0.0
    %1070 = vmatprep.subr.mxu0 0.0
    %1071 = vmatpush2.msra.mxu0 0.0
    %1072 = vmatprep.subr.mxu0 0.0
    %1073 = vmatpush2.msra.mxu0 0.0
    %1074 = vmatprep.subr.mxu0 0.0
    %1075 = vmatpush2.msra.mxu0 0.0
    %1076 = vmatprep.subr.mxu0 0.0
    %1077 = vmatpush2.msra.mxu0 0.0
    %1078 = vmatprep.subr.mxu0 0.0
    %1079 = vmatpush2.msra.mxu0 0.0
    %1080 = vmatprep.subr.mxu0 0.0
    %1081 = vmatpush2.msra.mxu0 0.0
    %1082 = vmatprep.subr.mxu0 0.0
    %1083 = vmatpush2.msra.mxu0 0.0
    %1084 = vmatprep.subr.mxu0 0.0
    %1085 = vmatpush2.msra.mxu0 0.0
    %1086 = vmatprep.subr.mxu0 0.0
    %1087 = vmatpush2.msra.mxu0 0.0
    %1088 = vmatprep.subr.mxu0 0.0
    %1089 = vmatpush2.msra.mxu0 0.0
    %1090 = vmatprep.subr.mxu0 0.0
    %1091 = vmatpush2.msra.mxu0 0.0
    %1092 = vmatprep.subr.mxu0 0.0
    %1093 = vmatpush2.msra.mxu0 0.0
    %1094 = vmatprep.subr.mxu0 0.0
    %1095 = vmatpush2.msra.mxu0 0.0
    %1096 = vmatprep.mubr.f32.mxu0 0.0
    %1097 = vmatmul.mubr.f32.gmra.mxu0 0.0
    %v1098 = vpop.f32.mrf.mxu0
    %v1099 = vadd.f32 0.0, %v1098
    %v1100 = vpop.f32.mrf.mxu0
    %1101 = vdwg.mxu0
    %v1102 = vadd.f32 %v1031, %v1099
    %v1103 = vtanh.pop %v1102
    %1104 = vst [vmem:[#allocation3] sm:$0xff] %v1103
    %v1105 = vld [vmem:[#allocation3 + $0x8] sm:$0xff]
    %1106 = vmatprep.subr.mxu0 0.0
    %1107 = vmatpush1.msra.mxu0 %v902
    %1108 = vmatprep.subr.mxu0 0.0
    %1109 = vmatpush1.msra.mxu0 %v901
    %1110 = vmatprep.subr.mxu0 0.0
    %1111 = vmatpush1.msra.mxu0 %v900
    %1112 = vmatprep.subr.mxu0 0.0
    %1113 = vmatpush1.msra.mxu0 %v899
    %1114 = vmatprep.subr.mxu0 0.0
    %1115 = vmatpush1.msra.mxu0 %v898
    %1116 = vmatprep.subr.mxu0 0.0
    %1117 = vmatpush1.msra.mxu0 %v897
    %1118 = vmatprep.subr.mxu0 0.0
    %1119 = vmatpush1.msra.mxu0 %v896
    %1120 = vmatprep.subr.mxu0 0.0
    %1121 = vmatpush1.msra.mxu0 %v895
    %1122 = vmatprep.subr.mxu0 0.0
    %1123 = vmatpush1.msra.mxu0 %v894
    %1124 = vmatprep.subr.mxu0 0.0
    %1125 = vmatpush1.msra.mxu0 %v893
    %1126 = vmatprep.subr.mxu0 0.0
    %1127 = vmatpush1.msra.mxu0 %v892
    %1128 = vmatprep.subr.mxu0 0.0
    %1129 = vmatpush1.msra.mxu0 %v891
    %1130 = vmatprep.subr.mxu0 0.0
    %1131 = vmatpush1.msra.mxu0 %v890
    %1132 = vmatprep.subr.mxu0 0.0
    %1133 = vmatpush1.msra.mxu0 %v889
    %1134 = vmatprep.subr.mxu0 0.0
    %1135 = vmatpush1.msra.mxu0 %v888
    %1136 = vmatprep.subr.mxu0 0.0
    %1137 = vmatpush1.msra.mxu0 %v887
    %1138 = vmatprep.subr.mxu0 0.0
    %1139 = vmatpush2.msra.mxu0 0.0
    %1140 = vmatprep.subr.mxu0 0.0
    %1141 = vmatpush2.msra.mxu0 0.0
    %1142 = vmatprep.subr.mxu0 0.0
    %1143 = vmatpush2.msra.mxu0 0.0
    %1144 = vmatprep.subr.mxu0 0.0
    %1145 = vmatpush2.msra.mxu0 0.0
    %1146 = vmatprep.subr.mxu0 0.0
    %1147 = vmatpush2.msra.mxu0 0.0
    %1148 = vmatprep.subr.mxu0 0.0
    %1149 = vmatpush2.msra.mxu0 0.0
    %1150 = vmatprep.subr.mxu0 0.0
    %1151 = vmatpush2.msra.mxu0 0.0
    %1152 = vmatprep.subr.mxu0 0.0
    %1153 = vmatpush2.msra.mxu0 0.0
    %1154 = vmatprep.subr.mxu0 0.0
    %1155 = vmatpush2.msra.mxu0 0.0
    %1156 = vmatprep.subr.mxu0 0.0
    %1157 = vmatpush2.msra.mxu0 0.0
    %1158 = vmatprep.subr.mxu0 0.0
    %1159 = vmatpush2.msra.mxu0 0.0
    %1160 = vmatprep.subr.mxu0 0.0
    %1161 = vmatpush2.msra.mxu0 0.0
    %1162 = vmatprep.subr.mxu0 0.0
    %1163 = vmatpush2.msra.mxu0 0.0
    %1164 = vmatprep.subr.mxu0 0.0
    %1165 = vmatpush2.msra.mxu0 0.0
    %1166 = vmatprep.subr.mxu0 0.0
    %1167 = vmatpush2.msra.mxu0 0.0
    %1168 = vmatprep.subr.mxu0 0.0
    %1169 = vmatpush2.msra.mxu0 0.0
    %1170 = vmatprep.mubr.f32.mxu0 0.0
    %1171 = vmatmul.mubr.f32.gmra.mxu0 %v1103
    %v1172 = vpop.f32.mrf.mxu0
    %v1173 = vadd.f32 0.0, %v1172
    %v1174 = vpop.f32.mrf.mxu0
    %1175 = vdwg.mxu0
    %v1176 = vadd.f32 %v1105, %v1173
    %v1177 = vtanh.pop %v1176
    %1178 = vst [vmem:[#allocation3 + $0x8] sm:$0xff] %v1177
    %v1179 = vld [vmem:[#allocation3 + $0x10] sm:$0xff]
    %1180 = vmatprep.subr.mxu0 0.0
    %1181 = vmatpush1.msra.mxu0 %v902
    %1182 = vmatprep.subr.mxu0 0.0
    %1183 = vmatpush1.msra.mxu0 %v901
    %1184 = vmatprep.subr.mxu0 0.0
    %1185 = vmatpush1.msra.mxu0 %v900
    %1186 = vmatprep.subr.mxu0 0.0
    %1187 = vmatpush1.msra.mxu0 %v899
    %1188 = vmatprep.subr.mxu0 0.0
    %1189 = vmatpush1.msra.mxu0 %v898
    %1190 = vmatprep.subr.mxu0 0.0
    %1191 = vmatpush1.msra.mxu0 %v897
    %1192 = vmatprep.subr.mxu0 0.0
    %1193 = vmatpush1.msra.mxu0 %v896
    %1194 = vmatprep.subr.mxu0 0.0
    %1195 = vmatpush1.msra.mxu0 %v895
    %1196 = vmatprep.subr.mxu0 0.0
    %1197 = vmatpush1.msra.mxu0 %v894
    %1198 = vmatprep.subr.mxu0 0.0
    %1199 = vmatpush1.msra.mxu0 %v893
    %1200 = vmatprep.subr.mxu0 0.0
    %1201 = vmatpush1.msra.mxu0 %v892
    %1202 = vmatprep.subr.mxu0 0.0
    %1203 = vmatpush1.msra.mxu0 %v891
    %1204 = vmatprep.subr.mxu0 0.0
    %1205 = vmatpush1.msra.mxu0 %v890
    %1206 = vmatprep.subr.mxu0 0.0
    %1207 = vmatpush1.msra.mxu0 %v889
    %1208 = vmatprep.subr.mxu0 0.0
    %1209 = vmatpush1.msra.mxu0 %v888
    %1210 = vmatprep.subr.mxu0 0.0
    %1211 = vmatpush1.msra.mxu0 %v887
    %1212 = vmatprep.subr.mxu0 0.0
    %1213 = vmatpush2.msra.mxu0 0.0
    %1214 = vmatprep.subr.mxu0 0.0
    %1215 = vmatpush2.msra.mxu0 0.0
    %1216 = vmatprep.subr.mxu0 0.0
    %1217 = vmatpush2.msra.mxu0 0.0
    %1218 = vmatprep.subr.mxu0 0.0
    %1219 = vmatpush2.msra.mxu0 0.0
    %1220 = vmatprep.subr.mxu0 0.0
    %1221 = vmatpush2.msra.mxu0 0.0
    %1222 = vmatprep.subr.mxu0 0.0
    %1223 = vmatpush2.msra.mxu0 0.0
    %1224 = vmatprep.subr.mxu0 0.0
    %1225 = vmatpush2.msra.mxu0 0.0
    %1226 = vmatprep.subr.mxu0 0.0
    %1227 = vmatpush2.msra.mxu0 0.0
    %1228 = vmatprep.subr.mxu0 0.0
    %1229 = vmatpush2.msra.mxu0 0.0
    %1230 = vmatprep.subr.mxu0 0.0
    %1231 = vmatpush2.msra.mxu0 0.0
    %1232 = vmatprep.subr.mxu0 0.0
    %1233 = vmatpush2.msra.mxu0 0.0
    %1234 = vmatprep.subr.mxu0 0.0
    %1235 = vmatpush2.msra.mxu0 0.0
    %1236 = vmatprep.subr.mxu0 0.0
    %1237 = vmatpush2.msra.mxu0 0.0
    %1238 = vmatprep.subr.mxu0 0.0
    %1239 = vmatpush2.msra.mxu0 0.0
    %1240 = vmatprep.subr.mxu0 0.0
    %1241 = vmatpush2.msra.mxu0 0.0
    %1242 = vmatprep.subr.mxu0 0.0
    %1243 = vmatpush2.msra.mxu0 0.0
    %1244 = vmatprep.mubr.f32.mxu0 0.0
    %1245 = vmatmul.mubr.f32.gmra.mxu0 %v1177
    %v1246 = vpop.f32.mrf.mxu0
    %v1247 = vadd.f32 0.0, %v1246
    %v1248 = vpop.f32.mrf.mxu0
    %1249 = vdwg.mxu0
    %v1250 = vadd.f32 %v1179, %v1247
    %v1251 = vtanh.pop %v1250
    %1252 = vst [vmem:[#allocation3 + $0x10] sm:$0xff] %v1251
    %v1253 = vld [vmem:[#allocation3 + $0x18] sm:$0xff]
    %1254 = vmatprep.subr.mxu0 0.0
    %1255 = vmatpush1.msra.mxu0 %v902
    %1256 = vmatprep.subr.mxu0 0.0
    %1257 = vmatpush1.msra.mxu0 %v901
    %1258 = vmatprep.subr.mxu0 0.0
    %1259 = vmatpush1.msra.mxu0 %v900
    %1260 = vmatprep.subr.mxu0 0.0
    %1261 = vmatpush1.msra.mxu0 %v899
    %1262 = vmatprep.subr.mxu0 0.0
    %1263 = vmatpush1.msra.mxu0 %v898
    %1264 = vmatprep.subr.mxu0 0.0
    %1265 = vmatpush1.msra.mxu0 %v897
    %1266 = vmatprep.subr.mxu0 0.0
    %1267 = vmatpush1.msra.mxu0 %v896
    %1268 = vmatprep.subr.mxu0 0.0
    %1269 = vmatpush1.msra.mxu0 %v895
    %1270 = vmatprep.subr.mxu0 0.0
    %1271 = vmatpush1.msra.mxu0 %v894
    %1272 = vmatprep.subr.mxu0 0.0
    %1273 = vmatpush1.msra.mxu0 %v893
    %1274 = vmatprep.subr.mxu0 0.0
    %1275 = vmatpush1.msra.mxu0 %v892
    %1276 = vmatprep.subr.mxu0 0.0
    %1277 = vmatpush1.msra.mxu0 %v891
    %1278 = vmatprep.subr.mxu0 0.0
    %1279 = vmatpush1.msra.mxu0 %v890
    %1280 = vmatprep.subr.mxu0 0.0
    %1281 = vmatpush1.msra.mxu0 %v889
    %1282 = vmatprep.subr.mxu0 0.0
    %1283 = vmatpush1.msra.mxu0 %v888
    %1284 = vmatprep.subr.mxu0 0.0
    %1285 = vmatpush1.msra.mxu0 %v887
    %1286 = vmatprep.subr.mxu0 0.0
    %1287 = vmatpush2.msra.mxu0 0.0
    %1288 = vmatprep.subr.mxu0 0.0
    %1289 = vmatpush2.msra.mxu0 0.0
    %1290 = vmatprep.subr.mxu0 0.0
    %1291 = vmatpush2.msra.mxu0 0.0
    %1292 = vmatprep.subr.mxu0 0.0
    %1293 = vmatpush2.msra.mxu0 0.0
    %1294 = vmatprep.subr.mxu0 0.0
    %1295 = vmatpush2.msra.mxu0 0.0
    %1296 = vmatprep.subr.mxu0 0.0
    %1297 = vmatpush2.msra.mxu0 0.0
    %1298 = vmatprep.subr.mxu0 0.0
    %1299 = vmatpush2.msra.mxu0 0.0
    %1300 = vmatprep.subr.mxu0 0.0
    %1301 = vmatpush2.msra.mxu0 0.0
    %1302 = vmatprep.subr.mxu0 0.0
    %1303 = vmatpush2.msra.mxu0 0.0
    %1304 = vmatprep.subr.mxu0 0.0
    %1305 = vmatpush2.msra.mxu0 0.0
    %1306 = vmatprep.subr.mxu0 0.0
    %1307 = vmatpush2.msra.mxu0 0.0
    %1308 = vmatprep.subr.mxu0 0.0
    %1309 = vmatpush2.msra.mxu0 0.0
    %1310 = vmatprep.subr.mxu0 0.0
    %1311 = vmatpush2.msra.mxu0 0.0
    %1312 = vmatprep.subr.mxu0 0.0
    %1313 = vmatpush2.msra.mxu0 0.0
    %1314 = vmatprep.subr.mxu0 0.0
    %1315 = vmatpush2.msra.mxu0 0.0
    %1316 = vmatprep.subr.mxu0 0.0
    %1317 = vmatpush2.msra.mxu0 0.0
    %1318 = vmatprep.mubr.f32.mxu0 0.0
    %1319 = vmatmul.mubr.f32.gmra.mxu0 %v1251
    %v1320 = vpop.f32.mrf.mxu0
    %v1321 = vadd.f32 0.0, %v1320
    %v1322 = vpop.f32.mrf.mxu0
    %1323 = vdwg.mxu0
    %v1324 = vadd.f32 %v1253, %v1321
    %v1325 = vtanh.pop %v1324
    %1326 = vst [vmem:[#allocation3 + $0x18] sm:$0xff] %v1325
    %v1327 = vld [vmem:[#allocation3 + $0x20] sm:$0xff]
    %1328 = vmatprep.subr.mxu0 0.0
    %1329 = vmatpush1.msra.mxu0 %v902
    %1330 = vmatprep.subr.mxu0 0.0
    %1331 = vmatpush1.msra.mxu0 %v901
    %1332 = vmatprep.subr.mxu0 0.0
    %1333 = vmatpush1.msra.mxu0 %v900
    %1334 = vmatprep.subr.mxu0 0.0
    %1335 = vmatpush1.msra.mxu0 %v899
    %1336 = vmatprep.subr.mxu0 0.0
    %1337 = vmatpush1.msra.mxu0 %v898
    %1338 = vmatprep.subr.mxu0 0.0
    %1339 = vmatpush1.msra.mxu0 %v897
    %1340 = vmatprep.subr.mxu0 0.0
    %1341 = vmatpush1.msra.mxu0 %v896
    %1342 = vmatprep.subr.mxu0 0.0
    %1343 = vmatpush1.msra.mxu0 %v895
    %1344 = vmatprep.subr.mxu0 0.0
    %1345 = vmatpush1.msra.mxu0 %v894
    %1346 = vmatprep.subr.mxu0 0.0
    %1347 = vmatpush1.msra.mxu0 %v893
    %1348 = vmatprep.subr.mxu0 0.0
    %1349 = vmatpush1.msra.mxu0 %v892
    %1350 = vmatprep.subr.mxu0 0.0
    %1351 = vmatpush1.msra.mxu0 %v891
    %1352 = vmatprep.subr.mxu0 0.0
    %1353 = vmatpush1.msra.mxu0 %v890
    %1354 = vmatprep.subr.mxu0 0.0
    %1355 = vmatpush1.msra.mxu0 %v889
    %1356 = vmatprep.subr.mxu0 0.0
    %1357 = vmatpush1.msra.mxu0 %v888
    %1358 = vmatprep.subr.mxu0 0.0
    %1359 = vmatpush1.msra.mxu0 %v887
    %1360 = vmatprep.subr.mxu0 0.0
    %1361 = vmatpush2.msra.mxu0 0.0
    %1362 = vmatprep.subr.mxu0 0.0
    %1363 = vmatpush2.msra.mxu0 0.0
    %1364 = vmatprep.subr.mxu0 0.0
    %1365 = vmatpush2.msra.mxu0 0.0
    %1366 = vmatprep.subr.mxu0 0.0
    %1367 = vmatpush2.msra.mxu0 0.0
    %1368 = vmatprep.subr.mxu0 0.0
    %1369 = vmatpush2.msra.mxu0 0.0
    %1370 = vmatprep.subr.mxu0 0.0
    %1371 = vmatpush2.msra.mxu0 0.0
    %1372 = vmatprep.subr.mxu0 0.0
    %1373 = vmatpush2.msra.mxu0 0.0
    %1374 = vmatprep.subr.mxu0 0.0
    %1375 = vmatpush2.msra.mxu0 0.0
    %1376 = vmatprep.subr.mxu0 0.0
    %1377 = vmatpush2.msra.mxu0 0.0
    %1378 = vmatprep.subr.mxu0 0.0
    %1379 = vmatpush2.msra.mxu0 0.0
    %1380 = vmatprep.subr.mxu0 0.0
    %1381 = vmatpush2.msra.mxu0 0.0
    %1382 = vmatprep.subr.mxu0 0.0
    %1383 = vmatpush2.msra.mxu0 0.0
    %1384 = vmatprep.subr.mxu0 0.0
    %1385 = vmatpush2.msra.mxu0 0.0
    %1386 = vmatprep.subr.mxu0 0.0
    %1387 = vmatpush2.msra.mxu0 0.0
    %1388 = vmatprep.subr.mxu0 0.0
    %1389 = vmatpush2.msra.mxu0 0.0
    %1390 = vmatprep.subr.mxu0 0.0
    %1391 = vmatpush2.msra.mxu0 0.0
    %1392 = vmatprep.mubr.f32.mxu0 0.0
    %1393 = vmatmul.mubr.f32.gmra.mxu0 %v1325
    %v1394 = vpop.f32.mrf.mxu0
    %v1395 = vadd.f32 0.0, %v1394
    %v1396 = vpop.f32.mrf.mxu0
    %1397 = vdwg.mxu0
    %v1398 = vadd.f32 %v1327, %v1395
    %v1399 = vtanh.pop %v1398
    %1400 = vst [vmem:[#allocation3 + $0x20] sm:$0xff] %v1399
    %v1401 = vld [vmem:[#allocation3 + $0x28] sm:$0xff]
    %1402 = vmatprep.subr.mxu0 0.0
    %1403 = vmatpush1.msra.mxu0 %v902
    %1404 = vmatprep.subr.mxu0 0.0
    %1405 = vmatpush1.msra.mxu0 %v901
    %1406 = vmatprep.subr.mxu0 0.0
    %1407 = vmatpush1.msra.mxu0 %v900
    %1408 = vmatprep.subr.mxu0 0.0
    %1409 = vmatpush1.msra.mxu0 %v899
    %1410 = vmatprep.subr.mxu0 0.0
    %1411 = vmatpush1.msra.mxu0 %v898
    %1412 = vmatprep.subr.mxu0 0.0
    %1413 = vmatpush1.msra.mxu0 %v897
    %1414 = vmatprep.subr.mxu0 0.0
    %1415 = vmatpush1.msra.mxu0 %v896
    %1416 = vmatprep.subr.mxu0 0.0
    %1417 = vmatpush1.msra.mxu0 %v895
    %1418 = vmatprep.subr.mxu0 0.0
    %1419 = vmatpush1.msra.mxu0 %v894
    %1420 = vmatprep.subr.mxu0 0.0
    %1421 = vmatpush1.msra.mxu0 %v893
    %1422 = vmatprep.subr.mxu0 0.0
    %1423 = vmatpush1.msra.mxu0 %v892
    %1424 = vmatprep.subr.mxu0 0.0
    %1425 = vmatpush1.msra.mxu0 %v891
    %1426 = vmatprep.subr.mxu0 0.0
    %1427 = vmatpush1.msra.mxu0 %v890
    %1428 = vmatprep.subr.mxu0 0.0
    %1429 = vmatpush1.msra.mxu0 %v889
    %1430 = vmatprep.subr.mxu0 0.0
    %1431 = vmatpush1.msra.mxu0 %v888
    %1432 = vmatprep.subr.mxu0 0.0
    %1433 = vmatpush1.msra.mxu0 %v887
    %1434 = vmatprep.subr.mxu0 0.0
    %1435 = vmatpush2.msra.mxu0 0.0
    %1436 = vmatprep.subr.mxu0 0.0
    %1437 = vmatpush2.msra.mxu0 0.0
    %1438 = vmatprep.subr.mxu0 0.0
    %1439 = vmatpush2.msra.mxu0 0.0
    %1440 = vmatprep.subr.mxu0 0.0
    %1441 = vmatpush2.msra.mxu0 0.0
    %1442 = vmatprep.subr.mxu0 0.0
    %1443 = vmatpush2.msra.mxu0 0.0
    %1444 = vmatprep.subr.mxu0 0.0
    %1445 = vmatpush2.msra.mxu0 0.0
    %1446 = vmatprep.subr.mxu0 0.0
    %1447 = vmatpush2.msra.mxu0 0.0
    %1448 = vmatprep.subr.mxu0 0.0
    %1449 = vmatpush2.msra.mxu0 0.0
    %1450 = vmatprep.subr.mxu0 0.0
    %1451 = vmatpush2.msra.mxu0 0.0
    %1452 = vmatprep.subr.mxu0 0.0
    %1453 = vmatpush2.msra.mxu0 0.0
    %1454 = vmatprep.subr.mxu0 0.0
    %1455 = vmatpush2.msra.mxu0 0.0
    %1456 = vmatprep.subr.mxu0 0.0
    %1457 = vmatpush2.msra.mxu0 0.0
    %1458 = vmatprep.subr.mxu0 0.0
    %1459 = vmatpush2.msra.mxu0 0.0
    %1460 = vmatprep.subr.mxu0 0.0
    %1461 = vmatpush2.msra.mxu0 0.0
    %1462 = vmatprep.subr.mxu0 0.0
    %1463 = vmatpush2.msra.mxu0 0.0
    %1464 = vmatprep.subr.mxu0 0.0
    %1465 = vmatpush2.msra.mxu0 0.0
    %1466 = vmatprep.mubr.f32.mxu0 0.0
    %1467 = vmatmul.mubr.f32.gmra.mxu0 %v1399
    %v1468 = vpop.f32.mrf.mxu0
    %v1469 = vadd.f32 0.0, %v1468
    %v1470 = vpop.f32.mrf.mxu0
    %1471 = vdwg.mxu0
    %v1472 = vadd.f32 %v1401, %v1469
    %v1473 = vtanh.pop %v1472
    %1474 = vst [vmem:[#allocation3 + $0x28] sm:$0xff] %v1473
    %v1475 = vld [vmem:[#allocation3 + $0x30] sm:$0xff]
    %1476 = vmatprep.subr.mxu0 0.0
    %1477 = vmatpush1.msra.mxu0 %v902
    %1478 = vmatprep.subr.mxu0 0.0
    %1479 = vmatpush1.msra.mxu0 %v901
    %1480 = vmatprep.subr.mxu0 0.0
    %1481 = vmatpush1.msra.mxu0 %v900
    %1482 = vmatprep.subr.mxu0 0.0
    %1483 = vmatpush1.msra.mxu0 %v899
    %1484 = vmatprep.subr.mxu0 0.0
    %1485 = vmatpush1.msra.mxu0 %v898
    %1486 = vmatprep.subr.mxu0 0.0
    %1487 = vmatpush1.msra.mxu0 %v897
    %1488 = vmatprep.subr.mxu0 0.0
    %1489 = vmatpush1.msra.mxu0 %v896
    %1490 = vmatprep.subr.mxu0 0.0
    %1491 = vmatpush1.msra.mxu0 %v895
    %1492 = vmatprep.subr.mxu0 0.0
    %1493 = vmatpush1.msra.mxu0 %v894
    %1494 = vmatprep.subr.mxu0 0.0
    %1495 = vmatpush1.msra.mxu0 %v893
    %1496 = vmatprep.subr.mxu0 0.0
    %1497 = vmatpush1.msra.mxu0 %v892
    %1498 = vmatprep.subr.mxu0 0.0
    %1499 = vmatpush1.msra.mxu0 %v891
    %1500 = vmatprep.subr.mxu0 0.0
    %1501 = vmatpush1.msra.mxu0 %v890
    %1502 = vmatprep.subr.mxu0 0.0
    %1503 = vmatpush1.msra.mxu0 %v889
    %1504 = vmatprep.subr.mxu0 0.0
    %1505 = vmatpush1.msra.mxu0 %v888
    %1506 = vmatprep.subr.mxu0 0.0
    %1507 = vmatpush1.msra.mxu0 %v887
    %1508 = vmatprep.subr.mxu0 0.0
    %1509 = vmatpush2.msra.mxu0 0.0
    %1510 = vmatprep.subr.mxu0 0.0
    %1511 = vmatpush2.msra.mxu0 0.0
    %1512 = vmatprep.subr.mxu0 0.0
    %1513 = vmatpush2.msra.mxu0 0.0
    %1514 = vmatprep.subr.mxu0 0.0
    %1515 = vmatpush2.msra.mxu0 0.0
    %1516 = vmatprep.subr.mxu0 0.0
    %1517 = vmatpush2.msra.mxu0 0.0
    %1518 = vmatprep.subr.mxu0 0.0
    %1519 = vmatpush2.msra.mxu0 0.0
    %1520 = vmatprep.subr.mxu0 0.0
    %1521 = vmatpush2.msra.mxu0 0.0
    %1522 = vmatprep.subr.mxu0 0.0
    %1523 = vmatpush2.msra.mxu0 0.0
    %1524 = vmatprep.subr.mxu0 0.0
    %1525 = vmatpush2.msra.mxu0 0.0
    %1526 = vmatprep.subr.mxu0 0.0
    %1527 = vmatpush2.msra.mxu0 0.0
    %1528 = vmatprep.subr.mxu0 0.0
    %1529 = vmatpush2.msra.mxu0 0.0
    %1530 = vmatprep.subr.mxu0 0.0
    %1531 = vmatpush2.msra.mxu0 0.0
    %1532 = vmatprep.subr.mxu0 0.0
    %1533 = vmatpush2.msra.mxu0 0.0
    %1534 = vmatprep.subr.mxu0 0.0
    %1535 = vmatpush2.msra.mxu0 0.0
    %1536 = vmatprep.subr.mxu0 0.0
    %1537 = vmatpush2.msra.mxu0 0.0
    %1538 = vmatprep.subr.mxu0 0.0
    %1539 = vmatpush2.msra.mxu0 0.0
    %1540 = vmatprep.mubr.f32.mxu0 0.0
    %1541 = vmatmul.mubr.f32.gmra.mxu0 %v1473
    %v1542 = vpop.f32.mrf.mxu0
    %v1543 = vadd.f32 0.0, %v1542
    %v1544 = vpop.f32.mrf.mxu0
    %1545 = vdwg.mxu0
    %v1546 = vadd.f32 %v1475, %v1543
    %v1547 = vtanh.pop %v1546
    %1548 = vst [vmem:[#allocation3 + $0x30] sm:$0xff] %v1547
    %v1549 = vld [vmem:[#allocation3 + $0x38] sm:$0xff]
    %1550 = vmatprep.subr.mxu0 0.0
    %1551 = vmatpush1.msra.mxu0 %v902
    %1552 = vmatprep.subr.mxu0 0.0
    %1553 = vmatpush1.msra.mxu0 %v901
    %1554 = vmatprep.subr.mxu0 0.0
    %1555 = vmatpush1.msra.mxu0 %v900
    %1556 = vmatprep.subr.mxu0 0.0
    %1557 = vmatpush1.msra.mxu0 %v899
    %1558 = vmatprep.subr.mxu0 0.0
    %1559 = vmatpush1.msra.mxu0 %v898
    %1560 = vmatprep.subr.mxu0 0.0
    %1561 = vmatpush1.msra.mxu0 %v897
    %1562 = vmatprep.subr.mxu0 0.0
    %1563 = vmatpush1.msra.mxu0 %v896
    %1564 = vmatprep.subr.mxu0 0.0
    %1565 = vmatpush1.msra.mxu0 %v895
    %1566 = vmatprep.subr.mxu0 0.0
    %1567 = vmatpush1.msra.mxu0 %v894
    %1568 = vmatprep.subr.mxu0 0.0
    %1569 = vmatpush1.msra.mxu0 %v893
    %1570 = vmatprep.subr.mxu0 0.0
    %1571 = vmatpush1.msra.mxu0 %v892
    %1572 = vmatprep.subr.mxu0 0.0
    %1573 = vmatpush1.msra.mxu0 %v891
    %1574 = vmatprep.subr.mxu0 0.0
    %1575 = vmatpush1.msra.mxu0 %v890
    %1576 = vmatprep.subr.mxu0 0.0
    %1577 = vmatpush1.msra.mxu0 %v889
    %1578 = vmatprep.subr.mxu0 0.0
    %1579 = vmatpush1.msra.mxu0 %v888
    %1580 = vmatprep.subr.mxu0 0.0
    %1581 = vmatpush1.msra.mxu0 %v887
    %1582 = vmatprep.subr.mxu0 0.0
    %1583 = vmatpush2.msra.mxu0 0.0
    %1584 = vmatprep.subr.mxu0 0.0
    %1585 = vmatpush2.msra.mxu0 0.0
    %1586 = vmatprep.subr.mxu0 0.0
    %1587 = vmatpush2.msra.mxu0 0.0
    %1588 = vmatprep.subr.mxu0 0.0
    %1589 = vmatpush2.msra.mxu0 0.0
    %1590 = vmatprep.subr.mxu0 0.0
    %1591 = vmatpush2.msra.mxu0 0.0
    %1592 = vmatprep.subr.mxu0 0.0
    %1593 = vmatpush2.msra.mxu0 0.0
    %1594 = vmatprep.subr.mxu0 0.0
    %1595 = vmatpush2.msra.mxu0 0.0
    %1596 = vmatprep.subr.mxu0 0.0
    %1597 = vmatpush2.msra.mxu0 0.0
    %1598 = vmatprep.subr.mxu0 0.0
    %1599 = vmatpush2.msra.mxu0 0.0
    %1600 = vmatprep.subr.mxu0 0.0
    %1601 = vmatpush2.msra.mxu0 0.0
    %1602 = vmatprep.subr.mxu0 0.0
    %1603 = vmatpush2.msra.mxu0 0.0
    %1604 = vmatprep.subr.mxu0 0.0
    %1605 = vmatpush2.msra.mxu0 0.0
    %1606 = vmatprep.subr.mxu0 0.0
    %1607 = vmatpush2.msra.mxu0 0.0
    %1608 = vmatprep.subr.mxu0 0.0
    %1609 = vmatpush2.msra.mxu0 0.0
    %1610 = vmatprep.subr.mxu0 0.0
    %1611 = vmatpush2.msra.mxu0 0.0
    %1612 = vmatprep.subr.mxu0 0.0
    %1613 = vmatpush2.msra.mxu0 0.0
    %1614 = vmatprep.mubr.f32.mxu0 0.0
    %1615 = vmatmul.mubr.f32.gmra.mxu0 %v1547
    %v1616 = vpop.f32.mrf.mxu0
    %v1617 = vadd.f32 0.0, %v1616
    %v1618 = vpop.f32.mrf.mxu0
    %1619 = vdwg.mxu0
    %v1620 = vadd.f32 %v1549, %v1617
    %v1621 = vtanh.pop %v1620
    %1622 = vst [vmem:[#allocation3 + $0x38] sm:$0xff] %v1621
    %s1623 = scalar_lea.vmem [#allocation16], 8
    %1624 = vst [vmem:[%s1623] sm:$0xff] %v1621
    %v1625 = vld [vmem:[#allocation3] sm:$0xff]
    %v1626 = vld [vmem:[#allocation3 + $0x8] sm:$0xff]
    %v1627 = vld [vmem:[#allocation3 + $0x10] sm:$0xff]
    %v1628 = vld [vmem:[#allocation3 + $0x18] sm:$0xff]
    %v1629 = vld [vmem:[#allocation3 + $0x20] sm:$0xff]
    %v1630 = vld [vmem:[#allocation3 + $0x28] sm:$0xff]
    %v1631 = vld [vmem:[#allocation3 + $0x30] sm:$0xff]
    %v1632 = vld [vmem:[#allocation3 + $0x38] sm:$0xff]
    %v1633 = vld [vmem:[#allocation13] sm:$0xff]
    %v1634 = vld [vmem:[#allocation13 + $0x8] sm:$0xff]
    %v1635 = vld [vmem:[#allocation13 + $0x10] sm:$0xff]
    %v1636 = vld [vmem:[#allocation13 + $0x18] sm:$0xff]
    %v1637 = vld [vmem:[#allocation13 + $0x20] sm:$0xff]
    %v1638 = vld [vmem:[#allocation13 + $0x28] sm:$0xff]
    %v1639 = vld [vmem:[#allocation13 + $0x30] sm:$0xff]
    %v1640 = vld [vmem:[#allocation13 + $0x38] sm:$0xff]
    %v1641 = vld [vmem:[#allocation13 + $0x40] sm:$0xff]
    %v1642 = vld [vmem:[#allocation13 + $0x48] sm:$0xff]
    %v1643 = vld [vmem:[#allocation13 + $0x50] sm:$0xff]
    %v1644 = vld [vmem:[#allocation13 + $0x58] sm:$0xff]
    %v1645 = vld [vmem:[#allocation13 + $0x60] sm:$0xff]
    %v1646 = vld [vmem:[#allocation13 + $0x68] sm:$0xff]
    %v1647 = vld [vmem:[#allocation13 + $0x70] sm:$0xff]
    %v1648 = vld [vmem:[#allocation13 + $0x78] sm:$0xff]
    %v1649 = vld [vmem:[%s8] sm:$0x1]
    %v1651 = vlaneseq
    %v1652 = vshrl.u32 %v1651, 7
    %v1653 = vsub.s32 0, %v1652
    %v1654 = vrot.slane %v1649, %v1653
    %1656 = vmatprep.subr.mxu0 0.0
    %1657 = vmatpush1.msra.mxu0 %v1648
    %1658 = vmatprep.subr.mxu0 0.0
    %1659 = vmatpush1.msra.mxu0 %v1647
    %1660 = vmatprep.subr.mxu0 0.0
    %1661 = vmatpush1.msra.mxu0 %v1646
    %1662 = vmatprep.subr.mxu0 0.0
    %1663 = vmatpush1.msra.mxu0 %v1645
    %1664 = vmatprep.subr.mxu0 0.0
    %1665 = vmatpush1.msra.mxu0 %v1644
    %1666 = vmatprep.subr.mxu0 0.0
    %1667 = vmatpush1.msra.mxu0 %v1643
    %1668 = vmatprep.subr.mxu0 0.0
    %1669 = vmatpush1.msra.mxu0 %v1642
    %1670 = vmatprep.subr.mxu0 0.0
    %1671 = vmatpush1.msra.mxu0 %v1641
    %1672 = vmatprep.subr.mxu0 0.0
    %1673 = vmatpush1.msra.mxu0 %v1640
    %1674 = vmatprep.subr.mxu0 0.0
    %1675 = vmatpush1.msra.mxu0 %v1639
    %1676 = vmatprep.subr.mxu0 0.0
    %1677 = vmatpush1.msra.mxu0 %v1638
    %1678 = vmatprep.subr.mxu0 0.0
    %1679 = vmatpush1.msra.mxu0 %v1637
    %1680 = vmatprep.subr.mxu0 0.0
    %1681 = vmatpush1.msra.mxu0 %v1636
    %1682 = vmatprep.subr.mxu0 0.0
    %1683 = vmatpush1.msra.mxu0 %v1635
    %1684 = vmatprep.subr.mxu0 0.0
    %1685 = vmatpush1.msra.mxu0 %v1634
    %1686 = vmatprep.subr.mxu0 0.0
    %1687 = vmatpush1.msra.mxu0 %v1633
    %1688 = vmatprep.subr.mxu0 0.0
    %1689 = vmatpush2.msra.mxu0 0.0
    %1690 = vmatprep.subr.mxu0 0.0
    %1691 = vmatpush2.msra.mxu0 0.0
    %1692 = vmatprep.subr.mxu0 0.0
    %1693 = vmatpush2.msra.mxu0 0.0
    %1694 = vmatprep.subr.mxu0 0.0
    %1695 = vmatpush2.msra.mxu0 0.0
    %1696 = vmatprep.subr.mxu0 0.0
    %1697 = vmatpush2.msra.mxu0 0.0
    %1698 = vmatprep.subr.mxu0 0.0
    %1699 = vmatpush2.msra.mxu0 0.0
    %1700 = vmatprep.subr.mxu0 0.0
    %1701 = vmatpush2.msra.mxu0 0.0
    %1702 = vmatprep.subr.mxu0 0.0
    %1703 = vmatpush2.msra.mxu0 0.0
    %1704 = vmatprep.subr.mxu0 0.0
    %1705 = vmatpush2.msra.mxu0 0.0
    %1706 = vmatprep.subr.mxu0 0.0
    %1707 = vmatpush2.msra.mxu0 0.0
    %1708 = vmatprep.subr.mxu0 0.0
    %1709 = vmatpush2.msra.mxu0 0.0
    %1710 = vmatprep.subr.mxu0 0.0
    %1711 = vmatpush2.msra.mxu0 0.0
    %1712 = vmatprep.subr.mxu0 0.0
    %1713 = vmatpush2.msra.mxu0 0.0
    %1714 = vmatprep.subr.mxu0 0.0
    %1715 = vmatpush2.msra.mxu0 0.0
    %1716 = vmatprep.subr.mxu0 0.0
    %1717 = vmatpush2.msra.mxu0 0.0
    %1718 = vmatprep.subr.mxu0 0.0
    %1719 = vmatpush2.msra.mxu0 0.0
    %1720 = vmatprep.mubr.f32.mxu0 0.0
    %1721 = vmatmul.mubr.f32.gmra.mxu0 %v1625
    %v1722 = vpop.f32.mrf.mxu0
    %v1723 = vadd.f32 %v1654, %v1722
    %v1724 = vpop.f32.mrf.mxu0
    %1725 = vmatprep.mubr.f32.mxu0 0.0
    %1726 = vmatmul.mubr.f32.gmra.mxu0 %v1626
    %v1727 = vpop.f32.mrf.mxu0
    %v1728 = vadd.f32 %v1654, %v1727
    %v1729 = vpop.f32.mrf.mxu0
    %1730 = vmatprep.mubr.f32.mxu0 0.0
    %1731 = vmatmul.mubr.f32.gmra.mxu0 %v1627
    %v1732 = vpop.f32.mrf.mxu0
    %v1733 = vadd.f32 %v1654, %v1732
    %v1734 = vpop.f32.mrf.mxu0
    %1735 = vmatprep.mubr.f32.mxu0 0.0
    %1736 = vmatmul.mubr.f32.gmra.mxu0 %v1628
    %v1737 = vpop.f32.mrf.mxu0
    %v1738 = vadd.f32 %v1654, %v1737
    %v1739 = vpop.f32.mrf.mxu0
    %1740 = vmatprep.mubr.f32.mxu0 0.0
    %1741 = vmatmul.mubr.f32.gmra.mxu0 %v1629
    %v1742 = vpop.f32.mrf.mxu0
    %v1743 = vadd.f32 %v1654, %v1742
    %v1744 = vpop.f32.mrf.mxu0
    %1745 = vmatprep.mubr.f32.mxu0 0.0
    %1746 = vmatmul.mubr.f32.gmra.mxu0 %v1630
    %v1747 = vpop.f32.mrf.mxu0
    %v1748 = vadd.f32 %v1654, %v1747
    %v1749 = vpop.f32.mrf.mxu0
    %1750 = vmatprep.mubr.f32.mxu0 0.0
    %1751 = vmatmul.mubr.f32.gmra.mxu0 %v1631
    %v1752 = vpop.f32.mrf.mxu0
    %v1753 = vadd.f32 %v1654, %v1752
    %v1754 = vpop.f32.mrf.mxu0
    %1755 = vmatprep.mubr.f32.mxu0 0.0
    %1756 = vmatmul.mubr.f32.gmra.mxu0 %v1632
    %v1757 = vpop.f32.mrf.mxu0
    %v1758 = vadd.f32 %v1654, %v1757
    %v1759 = vpop.f32.mrf.mxu0
    %1760 = vdwg.mxu0
    %1761 = vst [vmem:[#allocation15] sm:$0xff] %v1723
    %1762 = vst [vmem:[#allocation15 + $0x8] sm:$0xff] %v1728
    %1763 = vst [vmem:[#allocation15 + $0x10] sm:$0xff] %v1733
    %1764 = vst [vmem:[#allocation15 + $0x18] sm:$0xff] %v1738
    %1765 = vst [vmem:[#allocation15 + $0x20] sm:$0xff] %v1743
    %1766 = vst [vmem:[#allocation15 + $0x28] sm:$0xff] %v1748
    %1767 = vst [vmem:[#allocation15 + $0x30] sm:$0xff] %v1753
    %1768 = vst [vmem:[#allocation15 + $0x38] sm:$0xff] %v1758
    // Predicated region
    $region62: #{tpu_custom_call.1} parent=1 // pred_check
      _
    $region63: #{tpu_custom_call.1} parent=1 // pred_check_branch
      %1770 = sbr.rel (0) target = $region65
    $region64: #{tpu_custom_call.1} parent=1 // pred_region
      %s1772 = ssub.s32 1024, 1024
      %1773 = vsyncadd [#allocation6], %s1772
      %s1774 = sshll.u32 [#allocation15], 4
      %s1775 = int_to_ptr.vmem [resolvable:$true] %s1774
      %1780 = dma.vmem_to_hbm [thread:$0]  %s1775, 1024, %s9, [#allocation6], 128, 128, 8
    $region65: #{tpu_custom_call.1} parent=1 // pred_fallthru
      _
    // Predicated region
    $region66: #{tpu_custom_call.1} parent=1 // pred_check
      _
    $region67: #{tpu_custom_call.1} parent=1 // pred_check_branch
      %1782 = sbr.rel (0) target = $region69
    $region68: #{tpu_custom_call.1} parent=1 // pred_region
      %s1784 = ssub.s32 256, 256
      %1785 = vsyncadd [#allocation17], %s1784
      %s1786 = sshll.u32 [#allocation16], 4
      %s1787 = int_to_ptr.vmem [resolvable:$true] %s1786
      %1792 = dma.vmem_to_hbm [thread:$0]  %s1787, 256, %s10, [#allocation17], 128, 128, 8
    $region69: #{tpu_custom_call.1} parent=1 // pred_fallthru
      _
    // Predicated region
    $region70: #{tpu_custom_call.1} parent=1 // pred_check
      _
    $region71: #{tpu_custom_call.1} parent=1 // pred_check_branch
      %1794 = sbr.rel (0) target = $region73
    $region72: #{tpu_custom_call.1} parent=1 // pred_region
      %1795 = dma.done [#allocation6], 1024
    $region73: #{tpu_custom_call.1} parent=1 // pred_fallthru
      _
    // Predicated region
    $region74: #{tpu_custom_call.1} parent=1 // pred_check
      _
    $region75: #{tpu_custom_call.1} parent=1 // pred_check_branch
      %1797 = sbr.rel (0) target = $region77
    $region76: #{tpu_custom_call.1} parent=1 // pred_region
      %1798 = dma.done [#allocation17], 256
    $region77: #{tpu_custom_call.1} parent=1 // pred_fallthru
      _
    %1799 = vsyncpa [#allocation5], 1
    %1800 = vsyncpa [#allocation8], 1
    %1801 = vsyncpa [#allocation11], 1
    %1802 = vsyncpa [#allocation14], 1
    %1803 = vsyncpa [#allocation6], 1
    %1804 = vsyncpa [#allocation17], 1

</llo_original>
